<compile_context>
chip_gen: v7x
topology: tpu7x:2x2x1
jax: 0.10.0
libtpu: 0.0.40
codegen_flags: <defaults>
</compile_context>

<pallas_src>
import functools

import jax
import jax.numpy as jnp
from jax.experimental import pallas as pl
from jax.experimental.pallas import tpu as pltpu

LANES = 128


# ----------------------------- Pallas kernels ------------------------------

def _conv_tanh_pool_kernel(p_ref, w_ref, b_ref, o_ref, *, npool):
    """Fused im2col-matmul + bias + tanh + 2x2 max-pool for one image.

    p_ref : [4*npool, K_pad]  bf16  patch rows ordered (pool_member, ph, pw)
    w_ref : [K_pad, 128]      bf16  zero-padded conv weights (K x OC)
    b_ref : [1, 128]          f32   zero-padded bias
    o_ref : [npool, 128]      f32   pooled activations, rows = (ph, pw)
    """
    y = jnp.dot(p_ref[...], w_ref[...], preferred_element_type=jnp.float32)
    y = jnp.tanh(y + b_ref[...])
    # The four 2x2-pool members occupy contiguous, 8-aligned row blocks.
    a = y[0 * npool:1 * npool, :]
    b = y[1 * npool:2 * npool, :]
    c = y[2 * npool:3 * npool, :]
    d = y[3 * npool:4 * npool, :]
    o_ref[...] = jnp.maximum(jnp.maximum(a, b),
                             jnp.maximum(c, d)).astype(o_ref.dtype)


def _fc_stack_kernel(x_ref, w1_ref, b1_ref, w2_ref, b2_ref, w3_ref, b3_ref,
                     o_ref):
    """tanh(fc1) -> tanh(fc2) -> fc3, fused in one kernel (128-lane padded)."""
    h = jnp.dot(x_ref[...], w1_ref[...], preferred_element_type=jnp.float32)
    h = jnp.tanh(h + b1_ref[...])
    h = jnp.dot(h.astype(w2_ref.dtype), w2_ref[...],
                preferred_element_type=jnp.float32)
    h = jnp.tanh(h + b2_ref[...])
    h = jnp.dot(h.astype(w3_ref.dtype), w3_ref[...],
                preferred_element_type=jnp.float32)
    o_ref[...] = (h + b3_ref[...]).astype(o_ref.dtype)


# ------------------------------ conv wrapper --------------------------------

def _im2col_pool_grouped(x, k, pad, k_pad, npool_pad):
    """bf16 im2col patches, rows grouped by 2x2-pool member.

    Returns [N, 4*npool_pad, k_pad]; row m*npool_pad + ph*PW + pw of image n is
    the receptive field of conv output pixel (2*ph + m//2, 2*pw + m%2).
    Columns are ordered (c, kh, kw) and zero-padded to k_pad.
    """
    # TODO(synk): form the kxk shifted windows inside the conv kernel (manual
    # window DMA / pltpu.roll) to avoid materializing the 25x patch expansion
    # in HBM; for now the bf16 cast halves that traffic.
    N, C, H, W = x.shape
    xp = jnp.pad(x, ((0, 0), (0, 0), (pad, pad), (pad, pad)))
    OH = H + 2 * pad - k + 1
    OW = W + 2 * pad - k + 1
    PH, PW = OH // 2, OW // 2
    K = C * k * k
    cols = [xp[:, :, i:i + OH, j:j + OW] for i in range(k) for j in range(k)]
    pt = jnp.stack(cols, axis=0).reshape(k, k, N, C, OH, OW)
    pt = pt.transpose(2, 4, 5, 3, 0, 1).reshape(N, OH, OW, K)  # cols=(c,kh,kw)
    # Group spatial positions into 2x2 pool windows: oh = 2*ph+dh, ow = 2*pw+dw
    pt = pt.reshape(N, PH, 2, PW, 2, K).transpose(0, 2, 4, 1, 3, 5)
    pt = pt.reshape(N, 4, PH * PW, K)
    pt = jnp.pad(pt, ((0, 0), (0, 0), (0, npool_pad - PH * PW),
                      (0, k_pad - K)))
    return pt.reshape(N, 4 * npool_pad, k_pad).astype(jnp.bfloat16)


def conv_tanh_pool(x, w_pad, b_pad, *, k, pad):
    """max_pool2d(tanh(conv2d(x, w, stride=1, padding=pad)), 2).

    x: NCHW f32; w_pad: [K_pad, 128] bf16; b_pad: [1, 128] f32.
    Returns [N, PH, PW, 128] f32 (channels zero-padded to 128 lanes).
    """
    N, C, H, W = x.shape
    OH = H + 2 * pad - k + 1
    OW = W + 2 * pad - k + 1
    assert OH % 2 == 0 and OW % 2 == 0
    PH, PW = OH // 2, OW // 2
    npool = PH * PW
    npool_pad = ((npool + 7) // 8) * 8          # 8-aligned pool-member blocks
    k_pad = w_pad.shape[0]
    assert k_pad % LANES == 0 and k_pad >= C * k * k

    patches = _im2col_pool_grouped(x, k, pad, k_pad, npool_pad)
    m_rows = 4 * npool_pad

    out = pl.pallas_call(
        functools.partial(_conv_tanh_pool_kernel, npool=npool_pad),
        out_shape=jax.ShapeDtypeStruct((N, npool_pad, LANES), jnp.float32),
        grid=(N,),
        in_specs=[
            pl.BlockSpec((None, m_rows, k_pad), lambda n: (n, 0, 0)),
            pl.BlockSpec((k_pad, LANES), lambda n: (0, 0)),
            pl.BlockSpec((1, LANES), lambda n: (0, 0)),
        ],
        out_specs=pl.BlockSpec((None, npool_pad, LANES), lambda n: (n, 0, 0)),
        compiler_params=pltpu.CompilerParams(
            dimension_semantics=("parallel",),
            vmem_limit_bytes=32 * 1024 * 1024),
    )(patches, w_pad, b_pad)
    return out[:, :npool, :].reshape(N, PH, PW, LANES)


# ------------------------------- FC wrapper ----------------------------------

def fc_stack(x, w1, b1, w2, b2, w3, b3):
    """Fused fc1+tanh -> fc2+tanh -> fc3.  x: [N, 576] bf16 -> [N, 128] f32."""
    N, K = x.shape
    n_pad = ((N + 7) // 8) * 8
    if n_pad != N:
        x = jnp.pad(x, ((0, n_pad - N), (0, 0)))
    out = pl.pallas_call(
        _fc_stack_kernel,
        out_shape=jax.ShapeDtypeStruct((n_pad, LANES), jnp.float32),
        grid=(1,),
        in_specs=[
            pl.BlockSpec((n_pad, K), lambda i: (0, 0)),
            pl.BlockSpec((K, LANES), lambda i: (0, 0)),
            pl.BlockSpec((1, LANES), lambda i: (0, 0)),
            pl.BlockSpec((LANES, LANES), lambda i: (0, 0)),
            pl.BlockSpec((1, LANES), lambda i: (0, 0)),
            pl.BlockSpec((LANES, LANES), lambda i: (0, 0)),
            pl.BlockSpec((1, LANES), lambda i: (0, 0)),
        ],
        out_specs=pl.BlockSpec((n_pad, LANES), lambda i: (0, 0)),
        compiler_params=pltpu.CompilerParams(
            dimension_semantics=("arbitrary",),
            vmem_limit_bytes=32 * 1024 * 1024),
    )(x, w1, b1, w2, b2, w3, b3)
    return out[:N]


# ------------------------------ LeNet5 model ---------------------------------

def init_lenet5_params(key):
    ks = jax.random.split(key, 10)

    def u(k, shape, fan_in):
        bound = 1.0 / jnp.sqrt(fan_in)
        return jax.random.uniform(k, shape, jnp.float32, -bound, bound)

    return {
        "conv1_w": u(ks[0], (6, 3, 5, 5), 3 * 5 * 5),
        "conv1_b": u(ks[1], (6,), 3 * 5 * 5),
        "conv2_w": u(ks[2], (16, 6, 5, 5), 6 * 5 * 5),
        "conv2_b": u(ks[3], (16,), 6 * 5 * 5),
        "fc1_w": u(ks[4], (120, 16 * 6 * 6), 16 * 6 * 6),   # torch [out, in]
        "fc1_b": u(ks[5], (120,), 16 * 6 * 6),
        "fc2_w": u(ks[6], (84, 120), 120),
        "fc2_b": u(ks[7], (84,), 120),
        "fc3_w": u(ks[8], (10, 84), 84),
        "fc3_b": u(ks[9], (10,), 84),
    }


def _prep_conv(w, b, k_pad):
    oc, c, k, _ = w.shape
    K = c * k * k
    wp = jnp.zeros((k_pad, LANES), jnp.float32).at[:K, :oc].set(
        w.reshape(oc, K).T)
    bp = jnp.zeros((1, LANES), jnp.float32).at[0, :oc].set(b)
    return wp.astype(jnp.bfloat16), bp


def _prep_fc(w, b, in_pad, out_pad):
    out_f, in_f = w.shape
    wp = jnp.zeros((in_pad, out_pad), jnp.float32).at[:in_f, :out_f].set(w.T)
    bp = jnp.zeros((1, out_pad), jnp.float32).at[0, :out_f].set(b)
    return wp.astype(jnp.bfloat16), bp


def prepare_params(params):
    """One-time prep (outside jit): pad to 128 lanes, pre-transpose, bf16."""
    c1_w, c1_b = _prep_conv(params["conv1_w"], params["conv1_b"], k_pad=128)
    c2_w, c2_b = _prep_conv(params["conv2_w"], params["conv2_b"], k_pad=256)
    f1_w, f1_b = _prep_fc(params["fc1_w"], params["fc1_b"], 16 * 6 * 6, LANES)
    f2_w, f2_b = _prep_fc(params["fc2_w"], params["fc2_b"], LANES, LANES)
    f3_w, f3_b = _prep_fc(params["fc3_w"], params["fc3_b"], LANES, LANES)
    return {"c1_w": c1_w, "c1_b": c1_b, "c2_w": c2_w, "c2_b": c2_b,
            "f1_w": f1_w, "f1_b": f1_b, "f2_w": f2_w, "f2_b": f2_b,
            "f3_w": f3_w, "f3_b": f3_b}


def lenet5_forward(prep, x):
    # x: [N, 3, 32, 32] NCHW (32x32 spatial so fc1 sees 16*6*6 features).
    N = x.shape[0]
    h = conv_tanh_pool(x, prep["c1_w"], prep["c1_b"], k=5, pad=2)   # [N,16,16,128]
    h = h[..., :6].transpose(0, 3, 1, 2)                            # [N,6,16,16]
    h = conv_tanh_pool(h, prep["c2_w"], prep["c2_b"], k=5, pad=0)   # [N,6,6,128]
    # Flatten in torch's NCHW .view(-1, 576) order.
    h = h[..., :16].transpose(0, 3, 1, 2).reshape(N, 16 * 6 * 6)
    out = fc_stack(h.astype(jnp.bfloat16),
                   prep["f1_w"], prep["f1_b"],
                   prep["f2_w"], prep["f2_b"],
                   prep["f3_w"], prep["f3_b"])                      # [N,128]
    return out[:, :10]


if __name__ == "__main__":
    key = jax.random.PRNGKey(0)
    k_param, k_x = jax.random.split(key)
    params = init_lenet5_params(k_param)
    prep = prepare_params(params)                 # one-time weight prep
    x = jax.random.normal(k_x, (2, 3, 32, 32), jnp.float32)  # NCHW

    out = jax.jit(lenet5_forward)(prep, x)
    out = jax.block_until_ready(out)
    assert out.shape == (2, 10) and out.dtype == jnp.float32
    assert bool(jnp.all(jnp.isfinite(out)))
    print("KERNEL_OK")
</pallas_src>

<mosaic_0001>
module attributes {stable_mosaic.version = 11 : i64} {
  func.func @_conv_tanh_pool_kernel(%arg0: i32, %arg1: memref<1x1024x128xbf16, #tpu.memory_space<vmem>>, %arg2: memref<128x128xbf16, #tpu.memory_space<vmem>>, %arg3: memref<1x128xf32, #tpu.memory_space<vmem>>, %arg4: memref<1x256x128xf32, #tpu.memory_space<vmem>>) attributes {dimension_semantics = [#tpu.dimension_semantics<parallel>], iteration_bounds = array<i64: 2>, scalar_prefetch = 0 : i64, scratch_operands = 0 : i64, tpu.core_type = #tpu.core_type<tc>, window_params = [{transform_indices = @transform_0, window_bounds = array<i64: 1, 1024, 128>}, {pipeline_mode = #tpu.pipeline_mode<synchronous>, transform_indices = @transform_1, window_bounds = array<i64: 128, 128>}, {pipeline_mode = #tpu.pipeline_mode<synchronous>, transform_indices = @transform_2, window_bounds = array<i64: 1, 128>}, {transform_indices = @transform_3, window_bounds = array<i64: 1, 256, 128>}]} {
    %c0 = arith.constant 0 : index
    %c0_0 = arith.constant 0 : index
    %c0_1 = arith.constant 0 : index
    %0 = vector.load %arg1[%c0, %c0_0, %c0_1] : memref<1x1024x128xbf16, #tpu.memory_space<vmem>>, vector<1x1024x128xbf16>
    %1 = vector.shape_cast %0 : vector<1x1024x128xbf16> to vector<1024x128xbf16>
    %c0_2 = arith.constant 0 : index
    %c0_3 = arith.constant 0 : index
    %2 = vector.load %arg2[%c0_2, %c0_3] : memref<128x128xbf16, #tpu.memory_space<vmem>>, vector<128x128xbf16>
    %cst = arith.constant dense<0.000000e+00> : vector<1024x128xf32>
    %3 = tpu.matmul %1, %2, %cst {dimension_numbers = #tpu.dot_dimension_numbers<[1], [0], [0], [1], [0, 0, 1, 1], [], []>} : vector<1024x128xbf16>, vector<128x128xbf16>, vector<1024x128xf32> -> vector<1024x128xf32>
    %c0_4 = arith.constant 0 : index
    %c0_5 = arith.constant 0 : index
    %4 = vector.load %arg3[%c0_4, %c0_5] : memref<1x128xf32, #tpu.memory_space<vmem>>, vector<1x128xf32>
    %5 = vector.broadcast %4 : vector<1x128xf32> to vector<1024x128xf32>
    %6 = arith.addf %3, %5 : vector<1024x128xf32>
    %7 = math.tanh %6 : vector<1024x128xf32>
    %8 = vector.extract_strided_slice %7 {offsets = [0, 0], sizes = [256, 128], strides = [1, 1]} : vector<1024x128xf32> to vector<256x128xf32>
    %9 = vector.extract_strided_slice %7 {offsets = [256, 0], sizes = [256, 128], strides = [1, 1]} : vector<1024x128xf32> to vector<256x128xf32>
    %10 = vector.extract_strided_slice %7 {offsets = [512, 0], sizes = [256, 128], strides = [1, 1]} : vector<1024x128xf32> to vector<256x128xf32>
    %11 = vector.extract_strided_slice %7 {offsets = [768, 0], sizes = [256, 128], strides = [1, 1]} : vector<1024x128xf32> to vector<256x128xf32>
    %12 = arith.maximumf %8, %9 : vector<256x128xf32>
    %13 = arith.maximumf %10, %11 : vector<256x128xf32>
    %14 = arith.maximumf %12, %13 : vector<256x128xf32>
    %c0_6 = arith.constant 0 : index
    %c0_7 = arith.constant 0 : index
    %c0_8 = arith.constant 0 : index
    %15 = vector.load %arg4[%c0_6, %c0_7, %c0_8] : memref<1x256x128xf32, #tpu.memory_space<vmem>>, vector<1x256x128xf32>
    %16 = vector.shape_cast %15 : vector<1x256x128xf32> to vector<256x128xf32>
    %17 = vector.shape_cast %14 : vector<256x128xf32> to vector<1x256x128xf32>
    tpu.vector_store %arg4[%c0_6, %c0_7, %c0_8], %17 {strides = array<i32>} : memref<1x256x128xf32, #tpu.memory_space<vmem>>, vector<1x256x128xf32>,
    return
  }
  func.func @transform_0(%arg0: i32) -> (i32, i32, i32) {
    %c0_i32 = arith.constant 0 : i32
    %c0_i32_0 = arith.constant 0 : i32
    %c0_i32_1 = arith.constant 0 : i32
    return %arg0, %c0_i32, %c0_i32_0 : i32, i32, i32
  }
  func.func @transform_1(%arg0: i32) -> (i32, i32) {
    %c0_i32 = arith.constant 0 : i32
    %c0_i32_0 = arith.constant 0 : i32
    %c0_i32_1 = arith.constant 0 : i32
    return %c0_i32, %c0_i32_0 : i32, i32
  }
  func.func @transform_2(%arg0: i32) -> (i32, i32) {
    %c0_i32 = arith.constant 0 : i32
    %c0_i32_0 = arith.constant 0 : i32
    %c0_i32_1 = arith.constant 0 : i32
    return %c0_i32, %c0_i32_0 : i32, i32
  }
  func.func @transform_3(%arg0: i32) -> (i32, i32, i32) {
    %c0_i32 = arith.constant 0 : i32
    %c0_i32_0 = arith.constant 0 : i32
    %c0_i32_1 = arith.constant 0 : i32
    return %arg0, %c0_i32, %c0_i32_0 : i32, i32, i32
  }
}

module attributes {stable_mosaic.version = 11 : i64} {
  func.func @_conv_tanh_pool_kernel(%arg0: i32, %arg1: memref<1x160x256xbf16, #tpu.memory_space<vmem>>, %arg2: memref<256x128xbf16, #tpu.memory_space<vmem>>, %arg3: memref<1x128xf32, #tpu.memory_space<vmem>>, %arg4: memref<1x40x128xf32, #tpu.memory_space<vmem>>) attributes {dimension_semantics = [#tpu.dimension_semantics<parallel>], iteration_bounds = array<i64: 2>, scalar_prefetch = 0 : i64, scratch_operands = 0 : i64, tpu.core_type = #tpu.core_type<tc>, window_params = [{transform_indices = @transform_0, window_bounds = array<i64: 1, 160, 256>}, {pipeline_mode = #tpu.pipeline_mode<synchronous>, transform_indices = @transform_1, window_bounds = array<i64: 256, 128>}, {pipeline_mode = #tpu.pipeline_mode<synchronous>, transform_indices = @transform_2, window_bounds = array<i64: 1, 128>}, {transform_indices = @transform_3, window_bounds = array<i64: 1, 40, 128>}]} {
    %c0 = arith.constant 0 : index
    %c0_0 = arith.constant 0 : index
    %c0_1 = arith.constant 0 : index
    %0 = vector.load %arg1[%c0, %c0_0, %c0_1] : memref<1x160x256xbf16, #tpu.memory_space<vmem>>, vector<1x160x256xbf16>
    %1 = vector.shape_cast %0 : vector<1x160x256xbf16> to vector<160x256xbf16>
    %c0_2 = arith.constant 0 : index
    %c0_3 = arith.constant 0 : index
    %2 = vector.load %arg2[%c0_2, %c0_3] : memref<256x128xbf16, #tpu.memory_space<vmem>>, vector<256x128xbf16>
    %cst = arith.constant dense<0.000000e+00> : vector<160x128xf32>
    %3 = tpu.matmul %1, %2, %cst {dimension_numbers = #tpu.dot_dimension_numbers<[1], [0], [0], [1], [0, 0, 1, 1], [], []>} : vector<160x256xbf16>, vector<256x128xbf16>, vector<160x128xf32> -> vector<160x128xf32>
    %c0_4 = arith.constant 0 : index
    %c0_5 = arith.constant 0 : index
    %4 = vector.load %arg3[%c0_4, %c0_5] : memref<1x128xf32, #tpu.memory_space<vmem>>, vector<1x128xf32>
    %5 = vector.broadcast %4 : vector<1x128xf32> to vector<160x128xf32>
    %6 = arith.addf %3, %5 : vector<160x128xf32>
    %7 = math.tanh %6 : vector<160x128xf32>
    %8 = vector.extract_strided_slice %7 {offsets = [0, 0], sizes = [40, 128], strides = [1, 1]} : vector<160x128xf32> to vector<40x128xf32>
    %9 = vector.extract_strided_slice %7 {offsets = [40, 0], sizes = [40, 128], strides = [1, 1]} : vector<160x128xf32> to vector<40x128xf32>
    %10 = vector.extract_strided_slice %7 {offsets = [80, 0], sizes = [40, 128], strides = [1, 1]} : vector<160x128xf32> to vector<40x128xf32>
    %11 = vector.extract_strided_slice %7 {offsets = [120, 0], sizes = [40, 128], strides = [1, 1]} : vector<160x128xf32> to vector<40x128xf32>
    %12 = arith.maximumf %8, %9 : vector<40x128xf32>
    %13 = arith.maximumf %10, %11 : vector<40x128xf32>
    %14 = arith.maximumf %12, %13 : vector<40x128xf32>
    %c0_6 = arith.constant 0 : index
    %c0_7 = arith.constant 0 : index
    %c0_8 = arith.constant 0 : index
    %15 = vector.load %arg4[%c0_6, %c0_7, %c0_8] : memref<1x40x128xf32, #tpu.memory_space<vmem>>, vector<1x40x128xf32>
    %16 = vector.shape_cast %15 : vector<1x40x128xf32> to vector<40x128xf32>
    %17 = vector.shape_cast %14 : vector<40x128xf32> to vector<1x40x128xf32>
    tpu.vector_store %arg4[%c0_6, %c0_7, %c0_8], %17 {strides = array<i32>} : memref<1x40x128xf32, #tpu.memory_space<vmem>>, vector<1x40x128xf32>,
    return
  }
  func.func @transform_0(%arg0: i32) -> (i32, i32, i32) {
    %c0_i32 = arith.constant 0 : i32
    %c0_i32_0 = arith.constant 0 : i32
    %c0_i32_1 = arith.constant 0 : i32
    return %arg0, %c0_i32, %c0_i32_0 : i32, i32, i32
  }
  func.func @transform_1(%arg0: i32) -> (i32, i32) {
    %c0_i32 = arith.constant 0 : i32
    %c0_i32_0 = arith.constant 0 : i32
    %c0_i32_1 = arith.constant 0 : i32
    return %c0_i32, %c0_i32_0 : i32, i32
  }
  func.func @transform_2(%arg0: i32) -> (i32, i32) {
    %c0_i32 = arith.constant 0 : i32
    %c0_i32_0 = arith.constant 0 : i32
    %c0_i32_1 = arith.constant 0 : i32
    return %c0_i32, %c0_i32_0 : i32, i32
  }
  func.func @transform_3(%arg0: i32) -> (i32, i32, i32) {
    %c0_i32 = arith.constant 0 : i32
    %c0_i32_0 = arith.constant 0 : i32
    %c0_i32_1 = arith.constant 0 : i32
    return %arg0, %c0_i32, %c0_i32_0 : i32, i32, i32
  }
}

module attributes {stable_mosaic.version = 11 : i64} {
  func.func @_fc_stack_kernel(%arg0: i32, %arg1: memref<8x576xbf16, #tpu.memory_space<vmem>>, %arg2: memref<576x128xbf16, #tpu.memory_space<vmem>>, %arg3: memref<1x128xf32, #tpu.memory_space<vmem>>, %arg4: memref<128x128xbf16, #tpu.memory_space<vmem>>, %arg5: memref<1x128xf32, #tpu.memory_space<vmem>>, %arg6: memref<128x128xbf16, #tpu.memory_space<vmem>>, %arg7: memref<1x128xf32, #tpu.memory_space<vmem>>, %arg8: memref<8x128xf32, #tpu.memory_space<vmem>>) attributes {dimension_semantics = [#tpu.dimension_semantics<arbitrary>], iteration_bounds = array<i64: 1>, scalar_prefetch = 0 : i64, scratch_operands = 0 : i64, tpu.core_type = #tpu.core_type<tc>, window_params = [{pipeline_mode = #tpu.pipeline_mode<synchronous>, transform_indices = @transform_0, window_bounds = array<i64: 8, 576>}, {pipeline_mode = #tpu.pipeline_mode<synchronous>, transform_indices = @transform_1, window_bounds = array<i64: 576, 128>}, {pipeline_mode = #tpu.pipeline_mode<synchronous>, transform_indices = @transform_2, window_bounds = array<i64: 1, 128>}, {pipeline_mode = #tpu.pipeline_mode<synchronous>, transform_indices = @transform_3, window_bounds = array<i64: 128, 128>}, {pipeline_mode = #tpu.pipeline_mode<synchronous>, transform_indices = @transform_4, window_bounds = array<i64: 1, 128>}, {pipeline_mode = #tpu.pipeline_mode<synchronous>, transform_indices = @transform_5, window_bounds = array<i64: 128, 128>}, {pipeline_mode = #tpu.pipeline_mode<synchronous>, transform_indices = @transform_6, window_bounds = array<i64: 1, 128>}, {pipeline_mode = #tpu.pipeline_mode<synchronous>, transform_indices = @transform_7, window_bounds = array<i64: 8, 128>}]} {
    %c0 = arith.constant 0 : index
    %c0_0 = arith.constant 0 : index
    %0 = vector.load %arg1[%c0, %c0_0] : memref<8x576xbf16, #tpu.memory_space<vmem>>, vector<8x576xbf16>
    %c0_1 = arith.constant 0 : index
    %c0_2 = arith.constant 0 : index
    %1 = vector.load %arg2[%c0_1, %c0_2] : memref<576x128xbf16, #tpu.memory_space<vmem>>, vector<576x128xbf16>
    %cst = arith.constant dense<0.000000e+00> : vector<8x128xf32>
    %2 = tpu.matmul %0, %1, %cst {dimension_numbers = #tpu.dot_dimension_numbers<[1], [0], [0], [1], [0, 0, 1, 1], [], []>} : vector<8x576xbf16>, vector<576x128xbf16>, vector<8x128xf32> -> vector<8x128xf32>
    %c0_3 = arith.constant 0 : index
    %c0_4 = arith.constant 0 : index
    %3 = vector.load %arg3[%c0_3, %c0_4] : memref<1x128xf32, #tpu.memory_space<vmem>>, vector<1x128xf32>
    %4 = vector.broadcast %3 : vector<1x128xf32> to vector<8x128xf32>
    %5 = arith.addf %2, %4 : vector<8x128xf32>
    %6 = math.tanh %5 : vector<8x128xf32>
    %7 = arith.truncf %6 : vector<8x128xf32> to vector<8x128xbf16>
    %c0_5 = arith.constant 0 : index
    %c0_6 = arith.constant 0 : index
    %8 = vector.load %arg4[%c0_5, %c0_6] : memref<128x128xbf16, #tpu.memory_space<vmem>>, vector<128x128xbf16>
    %cst_7 = arith.constant dense<0.000000e+00> : vector<8x128xf32>
    %9 = tpu.matmul %7, %8, %cst_7 {dimension_numbers = #tpu.dot_dimension_numbers<[1], [0], [0], [1], [0, 0, 1, 1], [], []>} : vector<8x128xbf16>, vector<128x128xbf16>, vector<8x128xf32> -> vector<8x128xf32>
    %c0_8 = arith.constant 0 : index
    %c0_9 = arith.constant 0 : index
    %10 = vector.load %arg5[%c0_8, %c0_9] : memref<1x128xf32, #tpu.memory_space<vmem>>, vector<1x128xf32>
    %11 = vector.broadcast %10 : vector<1x128xf32> to vector<8x128xf32>
    %12 = arith.addf %9, %11 : vector<8x128xf32>
    %13 = math.tanh %12 : vector<8x128xf32>
    %14 = arith.truncf %13 : vector<8x128xf32> to vector<8x128xbf16>
    %c0_10 = arith.constant 0 : index
    %c0_11 = arith.constant 0 : index
    %15 = vector.load %arg6[%c0_10, %c0_11] : memref<128x128xbf16, #tpu.memory_space<vmem>>, vector<128x128xbf16>
    %cst_12 = arith.constant dense<0.000000e+00> : vector<8x128xf32>
    %16 = tpu.matmul %14, %15, %cst_12 {dimension_numbers = #tpu.dot_dimension_numbers<[1], [0], [0], [1], [0, 0, 1, 1], [], []>} : vector<8x128xbf16>, vector<128x128xbf16>, vector<8x128xf32> -> vector<8x128xf32>
    %c0_13 = arith.constant 0 : index
    %c0_14 = arith.constant 0 : index
    %17 = vector.load %arg7[%c0_13, %c0_14] : memref<1x128xf32, #tpu.memory_space<vmem>>, vector<1x128xf32>
    %18 = vector.broadcast %17 : vector<1x128xf32> to vector<8x128xf32>
    %19 = arith.addf %16, %18 : vector<8x128xf32>
    %c0_15 = arith.constant 0 : index
    %c0_16 = arith.constant 0 : index
    %20 = vector.load %arg8[%c0_15, %c0_16] : memref<8x128xf32, #tpu.memory_space<vmem>>, vector<8x128xf32>
    tpu.vector_store %arg8[%c0_15, %c0_16], %19 {strides = array<i32>} : memref<8x128xf32, #tpu.memory_space<vmem>>, vector<8x128xf32>,
    return
  }
  func.func @transform_0(%arg0: i32) -> (i32, i32) {
    %c0_i32 = arith.constant 0 : i32
    %c0_i32_0 = arith.constant 0 : i32
    %c0_i32_1 = arith.constant 0 : i32
    return %c0_i32, %c0_i32_0 : i32, i32
  }
  func.func @transform_1(%arg0: i32) -> (i32, i32) {
    %c0_i32 = arith.constant 0 : i32
    %c0_i32_0 = arith.constant 0 : i32
    %c0_i32_1 = arith.constant 0 : i32
    return %c0_i32, %c0_i32_0 : i32, i32
  }
  func.func @transform_2(%arg0: i32) -> (i32, i32) {
    %c0_i32 = arith.constant 0 : i32
    %c0_i32_0 = arith.constant 0 : i32
    %c0_i32_1 = arith.constant 0 : i32
    return %c0_i32, %c0_i32_0 : i32, i32
  }
  func.func @transform_3(%arg0: i32) -> (i32, i32) {
    %c0_i32 = arith.constant 0 : i32
    %c0_i32_0 = arith.constant 0 : i32
    %c0_i32_1 = arith.constant 0 : i32
    return %c0_i32, %c0_i32_0 : i32, i32
  }
  func.func @transform_4(%arg0: i32) -> (i32, i32) {
    %c0_i32 = arith.constant 0 : i32
    %c0_i32_0 = arith.constant 0 : i32
    %c0_i32_1 = arith.constant 0 : i32
    return %c0_i32, %c0_i32_0 : i32, i32
  }
  func.func @transform_5(%arg0: i32) -> (i32, i32) {
    %c0_i32 = arith.constant 0 : i32
    %c0_i32_0 = arith.constant 0 : i32
    %c0_i32_1 = arith.constant 0 : i32
    return %c0_i32, %c0_i32_0 : i32, i32
  }
  func.func @transform_6(%arg0: i32) -> (i32, i32) {
    %c0_i32 = arith.constant 0 : i32
    %c0_i32_0 = arith.constant 0 : i32
    %c0_i32_1 = arith.constant 0 : i32
    return %c0_i32, %c0_i32_0 : i32, i32
  }
  func.func @transform_7(%arg0: i32) -> (i32, i32) {
    %c0_i32 = arith.constant 0 : i32
    %c0_i32_0 = arith.constant 0 : i32
    %c0_i32_1 = arith.constant 0 : i32
    return %c0_i32, %c0_i32_0 : i32, i32
  }
}

</mosaic_0001>

<llo_original>
// kernel: lenet5_forward.3
$region0: #{lenet5_forward.3}
  #allocation0 [shape = 'u32[]', space=smem, size = 0x4, offset = 0x4, fixed_abs, tag = 'smem constant byte address 0x4 - core index']
  #allocation1 [shape = 'u32[144,128]{1,0:T(1,128)}', space=vmem, size = 0x12000, scoped, tag = 'internal scratch']
  %s0 = inlined_call_operand.vmem [shape: bf16[2,1024,128], index: 0, kind: input, shape index: {}]
  %s1 = inlined_call_operand.vmem [shape: bf16[128,128], index: 1, kind: input, shape index: {}]
  %s2 = inlined_call_operand.vmem [shape: f32[1,128], index: 2, kind: input, shape index: {}]
  %s3 = inlined_call_operand.vmem [shape: f32[2,256,128], index: 3, kind: output, shape index: {}]
  %s4 = sld [smem:[#allocation0]]
  $region45: #{lenet5_forward.3} parent=0
    _
  %s6 = ssub.s32 1, %s4
  %s7 = scalar_select 0, %s6, %s4
  loop: start=0, step=1, limit=4
  $region2: #{lenet5_forward.3} parent=0 // loop_pre_header
    _
  $region3: #{lenet5_forward.3} parent=0 // loop_header
    %s9 = sphi 0, %s13
    %p10 = scmp.ge.s32.totalorder %s9, 4
    %s19 = sphi 0, %s21
    %s22 = sphi 0, %s19
    %s23 = sphi 0, %s22
    %s39 = sphi 0, %s23
    %s43 = sphi 0, %s43
    %s45 = sphi 0, %s43
    %s46 = sphi 0, %s45
    %s60 = sphi 0, %s46
    %s64 = sphi 0, %s64
    %s66 = sphi 0, %s64
    %s67 = sphi 0, %s66
    %s81 = sphi 0, %s67
    %s87 = sphi 0, %s89
    %s90 = sphi 0, %s87
    %s91 = sphi 0, %s90
    %s107 = sphi 0, %s91
  $region4: #{lenet5_forward.3} parent=0 // loop_header_branch
    %12 = sbr.rel (%p10) target = $region8
  $region5: #{lenet5_forward.3} parent=0 // loop_body
    %s14 = ssub.s32 %s9, 1
    %s15 = ssub.s32 %s9, 2
    %s16 = sadd.s32 %s9, 1
    %s17 = ssub.s32 %s9, %s16
    %p18 = scmp.eq.s32.totalorder %s17, 0
    %s20 = sadd.s32 %s19, 1
    %s21 = scalar_select %p18, %s19, %s20
    %p24 = pneg %p18
    %p25 = scmp.eq.s32.totalorder %s9, 1
    %p26 = por %p24, %p25
    %p27 = scmp.ne.s32.totalorder %s19, %s22
    %p28 = scmp.eq.s32.totalorder %s9, 0
    %p29 = por %p27, %p28
    %p30 = scmp.ne.s32.totalorder %s19, %s22
    %p31 = scmp.eq.s32.totalorder %s14, 1
    %p32 = por %p30, %p31
    %p33 = scmp.ne.s32.totalorder %s22, %s23
    %p34 = scmp.eq.s32.totalorder %s14, 0
    %p35 = por %p33, %p34
    %p36 = scmp.ne.s32.totalorder %s22, %s23
    %p37 = scmp.eq.s32.totalorder %s15, 1
    %p38 = por %p36, %p37
    %p40 = scmp.ne.s32.totalorder %s23, %s39
    %p41 = scmp.eq.s32.totalorder %s15, 0
    %p42 = por %p40, %p41
    %s44 = sadd.s32 %s43, 1
    %p47 = scmp.eq.s32.totalorder %s9, 1
    %p48 = scmp.ne.s32.totalorder %s43, %s45
    %p49 = scmp.eq.s32.totalorder %s9, 0
    %p50 = por %p48, %p49
    %p51 = scmp.ne.s32.totalorder %s43, %s45
    %p52 = scmp.eq.s32.totalorder %s14, 1
    %p53 = por %p51, %p52
    %p54 = scmp.ne.s32.totalorder %s45, %s46
    %p55 = scmp.eq.s32.totalorder %s14, 0
    %p56 = por %p54, %p55
    %p57 = scmp.ne.s32.totalorder %s45, %s46
    %p58 = scmp.eq.s32.totalorder %s15, 1
    %p59 = por %p57, %p58
    %p61 = scmp.ne.s32.totalorder %s46, %s60
    %p62 = scmp.eq.s32.totalorder %s15, 0
    %p63 = por %p61, %p62
    %s65 = sadd.s32 %s64, 1
    %p68 = scmp.eq.s32.totalorder %s9, 1
    %p69 = scmp.ne.s32.totalorder %s64, %s66
    %p70 = scmp.eq.s32.totalorder %s9, 0
    %p71 = por %p69, %p70
    %p72 = scmp.ne.s32.totalorder %s64, %s66
    %p73 = scmp.eq.s32.totalorder %s14, 1
    %p74 = por %p72, %p73
    %p75 = scmp.ne.s32.totalorder %s66, %s67
    %p76 = scmp.eq.s32.totalorder %s14, 0
    %p77 = por %p75, %p76
    %p78 = scmp.ne.s32.totalorder %s66, %s67
    %p79 = scmp.eq.s32.totalorder %s15, 1
    %p80 = por %p78, %p79
    %p82 = scmp.ne.s32.totalorder %s67, %s81
    %p83 = scmp.eq.s32.totalorder %s15, 0
    %p84 = por %p82, %p83
    %s85 = ssub.s32 %s9, %s16
    %p86 = scmp.eq.s32.totalorder %s85, 0
    %s88 = sadd.s32 %s87, 1
    %s89 = scalar_select %p86, %s87, %s88
    %p92 = pneg %p86
    %p93 = scmp.eq.s32.totalorder %s9, 1
    %p94 = por %p92, %p93
    %p95 = scmp.ne.s32.totalorder %s87, %s90
    %p96 = scmp.eq.s32.totalorder %s9, 0
    %p97 = por %p95, %p96
    %p98 = scmp.ne.s32.totalorder %s87, %s90
    %p99 = scmp.eq.s32.totalorder %s14, 1
    %p100 = por %p98, %p99
    %p101 = scmp.ne.s32.totalorder %s90, %s91
    %p102 = scmp.eq.s32.totalorder %s14, 0
    %p103 = por %p101, %p102
    %p104 = scmp.ne.s32.totalorder %s90, %s91
    %p105 = scmp.eq.s32.totalorder %s15, 1
    %p106 = por %p104, %p105
    %p108 = scmp.ne.s32.totalorder %s91, %s107
    %p109 = scmp.eq.s32.totalorder %s15, 0
    %p110 = por %p108, %p109
    %p111 = scmp.le.s32.totalorder 1, %s9
    %p112 = scmp.lt.s32.totalorder %s9, 3
    %p113 = pnand %p111, %p112
    %p114 = pneg %p113
    // Predicated region
    $region9: #{lenet5_forward.3} parent=5 // pred_check
      _
    $region10: #{lenet5_forward.3} parent=5 // pred_check_branch
      %116 = sbr.rel (%p113) target = $region12
    $region11: #{lenet5_forward.3} parent=5 // pred_region
      %s117 = ssub.s32 %s9, 1
      // Predicated region
      $region13: #{lenet5_forward.3} parent=11 // pred_check
        %p118 = pneg %p56
      $region14: #{lenet5_forward.3} parent=11 // pred_check_branch
        %120 = sbr.rel (%p118) target = $region16
      $region15: #{lenet5_forward.3} parent=11 // pred_region
        _
      $region16: #{lenet5_forward.3} parent=11 // pred_fallthru
        _
      // Predicated region
      $region17: #{lenet5_forward.3} parent=11 // pred_check
        %p121 = pneg %p77
      $region18: #{lenet5_forward.3} parent=11 // pred_check_branch
        %123 = sbr.rel (%p121) target = $region20
      $region19: #{lenet5_forward.3} parent=11 // pred_region
        _
      $region20: #{lenet5_forward.3} parent=11 // pred_fallthru
        _
    $region12: #{lenet5_forward.3} parent=5 // pred_fallthru
      _
    %p124 = scmp.lt.s32.totalorder %s9, 2
    // Predicated region
    $region21: #{lenet5_forward.3} parent=5 // pred_check
      %p125 = pneg %p124
    $region22: #{lenet5_forward.3} parent=5 // pred_check_branch
      %127 = sbr.rel (%p125) target = $region24
    $region23: #{lenet5_forward.3} parent=5 // pred_region
      // Predicated region
      $region25: #{lenet5_forward.3} parent=23 // pred_check
        %p128 = pneg %p29
      $region26: #{lenet5_forward.3} parent=23 // pred_check_branch
        %130 = sbr.rel (%p128) target = $region28
      $region27: #{lenet5_forward.3} parent=23 // pred_region
        %p131 = scmp.lt.s32.totalorder %s9, 1
        %s132 = scalar_select %p131, %s9, 1
        %s133 = smul.addr %s132, 128
        %s134 = smul.addr %s133, 4
        %s135 = scalar_lea.vmem %s0, %s134
      $region28: #{lenet5_forward.3} parent=23 // pred_fallthru
        _
    $region24: #{lenet5_forward.3} parent=5 // pred_fallthru
      _
    %p136 = scmp.le.s32.totalorder 1, %s9
    %p137 = scmp.lt.s32.totalorder %s9, 3
    %p138 = pnand %p136, %p137
    %p139 = pneg %p138
    // Predicated region
    $region29: #{lenet5_forward.3} parent=5 // pred_check
      _
    $region30: #{lenet5_forward.3} parent=5 // pred_check_branch
      %141 = sbr.rel (%p138) target = $region32
    $region31: #{lenet5_forward.3} parent=5 // pred_region
      %s142 = ssub.s32 %s9, 1
      %p143 = scmp.lt.s32.totalorder %s14, 1
      %s144 = scalar_select %p143, %s14, 1
      %s145 = smul.addr %s144, 128
      %s146 = smul.addr %s145, 4
      %s147 = scalar_lea.vmem %s0, %s146
      %p148 = pneg %p35
      %p149 = pneg %p32
      %p150 = pneg %p56
      %p151 = pneg %p53
      %p152 = pneg %p77
      %p153 = pneg %p74
      %p154 = pneg %p103
      %p155 = pneg %p100
      %p156 = scmp.lt.s32.totalorder %s14, 1
      %s157 = scalar_select %p156, %s14, 1
      %s158 = smul.addr %s157, 32
      %s159 = smul.addr %s158, 8
      %s160 = scalar_lea.vmem %s3, %s159
      %p161 = scmp.lt.s32.totalorder %s14, 1
      %s162 = scalar_select %p161, %s14, 1
      %s163 = smul.addr %s162, 128
      %s164 = smul.addr %s163, 4
      %s165 = scalar_lea.vmem %s0, %s164
      %p166 = scmp.lt.s32.totalorder %s14, 1
      %s167 = scalar_select %p166, %s14, 1
      %s168 = smul.addr %s167, 32
      %s169 = smul.addr %s168, 8
      %s170 = scalar_lea.vmem %s3, %s169
      %v172 = vld [vmem:[%s165] sm:$0xf]
      %v173 = vld [vmem:[%s165 + $0x4] sm:$0xf]
      %v174 = vld [vmem:[%s165 + $0x8] sm:$0xf]
      %v175 = vld [vmem:[%s165 + $0xc] sm:$0xf]
      %v176 = vld [vmem:[%s165 + $0x10] sm:$0xf]
      %v177 = vld [vmem:[%s165 + $0x14] sm:$0xf]
      %v178 = vld [vmem:[%s165 + $0x18] sm:$0xf]
      %v179 = vld [vmem:[%s165 + $0x1c] sm:$0xf]
      %v180 = vld [vmem:[%s165 + $0x20] sm:$0xf]
      %v181 = vld [vmem:[%s165 + $0x24] sm:$0xf]
      %v182 = vld [vmem:[%s165 + $0x28] sm:$0xf]
      %v183 = vld [vmem:[%s165 + $0x2c] sm:$0xf]
      %v184 = vld [vmem:[%s165 + $0x30] sm:$0xf]
      %v185 = vld [vmem:[%s165 + $0x34] sm:$0xf]
      %v186 = vld [vmem:[%s165 + $0x38] sm:$0xf]
      %v187 = vld [vmem:[%s165 + $0x3c] sm:$0xf]
      %v188 = vld [vmem:[%s165 + $0x40] sm:$0xf]
      %v189 = vld [vmem:[%s165 + $0x44] sm:$0xf]
      %v190 = vld [vmem:[%s165 + $0x48] sm:$0xf]
      %v191 = vld [vmem:[%s165 + $0x4c] sm:$0xf]
      %v192 = vld [vmem:[%s165 + $0x50] sm:$0xf]
      %v193 = vld [vmem:[%s165 + $0x54] sm:$0xf]
      %v194 = vld [vmem:[%s165 + $0x58] sm:$0xf]
      %v195 = vld [vmem:[%s165 + $0x5c] sm:$0xf]
      %v196 = vld [vmem:[%s165 + $0x60] sm:$0xf]
      %v197 = vld [vmem:[%s165 + $0x64] sm:$0xf]
      %v198 = vld [vmem:[%s165 + $0x68] sm:$0xf]
      %v199 = vld [vmem:[%s165 + $0x6c] sm:$0xf]
      %v200 = vld [vmem:[%s165 + $0x70] sm:$0xf]
      %v201 = vld [vmem:[%s165 + $0x74] sm:$0xf]
      %v202 = vld [vmem:[%s165 + $0x78] sm:$0xf]
      %v203 = vld [vmem:[%s165 + $0x7c] sm:$0xf]
      %v204 = vld [vmem:[%s165 + $0x80] sm:$0xf]
      %v205 = vld [vmem:[%s165 + $0x84] sm:$0xf]
      %v206 = vld [vmem:[%s165 + $0x88] sm:$0xf]
      %v207 = vld [vmem:[%s165 + $0x8c] sm:$0xf]
      %v208 = vld [vmem:[%s165 + $0x90] sm:$0xf]
      %v209 = vld [vmem:[%s165 + $0x94] sm:$0xf]
      %v210 = vld [vmem:[%s165 + $0x98] sm:$0xf]
      %v211 = vld [vmem:[%s165 + $0x9c] sm:$0xf]
      %v212 = vld [vmem:[%s165 + $0xa0] sm:$0xf]
      %v213 = vld [vmem:[%s165 + $0xa4] sm:$0xf]
      %v214 = vld [vmem:[%s165 + $0xa8] sm:$0xf]
      %v215 = vld [vmem:[%s165 + $0xac] sm:$0xf]
      %v216 = vld [vmem:[%s165 + $0xb0] sm:$0xf]
      %v217 = vld [vmem:[%s165 + $0xb4] sm:$0xf]
      %v218 = vld [vmem:[%s165 + $0xb8] sm:$0xf]
      %v219 = vld [vmem:[%s165 + $0xbc] sm:$0xf]
      %v220 = vld [vmem:[%s165 + $0xc0] sm:$0xf]
      %v221 = vld [vmem:[%s165 + $0xc4] sm:$0xf]
      %v222 = vld [vmem:[%s165 + $0xc8] sm:$0xf]
      %v223 = vld [vmem:[%s165 + $0xcc] sm:$0xf]
      %v224 = vld [vmem:[%s165 + $0xd0] sm:$0xf]
      %v225 = vld [vmem:[%s165 + $0xd4] sm:$0xf]
      %v226 = vld [vmem:[%s165 + $0xd8] sm:$0xf]
      %v227 = vld [vmem:[%s165 + $0xdc] sm:$0xf]
      %v228 = vld [vmem:[%s165 + $0xe0] sm:$0xf]
      %v229 = vld [vmem:[%s165 + $0xe4] sm:$0xf]
      %v230 = vld [vmem:[%s165 + $0xe8] sm:$0xf]
      %v231 = vld [vmem:[%s165 + $0xec] sm:$0xf]
      %v232 = vld [vmem:[%s165 + $0xf0] sm:$0xf]
      %v233 = vld [vmem:[%s165 + $0xf4] sm:$0xf]
      %v234 = vld [vmem:[%s165 + $0xf8] sm:$0xf]
      %v235 = vld [vmem:[%s165 + $0xfc] sm:$0xf]
      %v236 = vld [vmem:[%s165 + $0x100] sm:$0xf]
      %v237 = vld [vmem:[%s165 + $0x104] sm:$0xf]
      %v238 = vld [vmem:[%s165 + $0x108] sm:$0xf]
      %v239 = vld [vmem:[%s165 + $0x10c] sm:$0xf]
      %v240 = vld [vmem:[%s165 + $0x110] sm:$0xf]
      %v241 = vld [vmem:[%s165 + $0x114] sm:$0xf]
      %v242 = vld [vmem:[%s165 + $0x118] sm:$0xf]
      %v243 = vld [vmem:[%s165 + $0x11c] sm:$0xf]
      %v244 = vld [vmem:[%s165 + $0x120] sm:$0xf]
      %v245 = vld [vmem:[%s165 + $0x124] sm:$0xf]
      %v246 = vld [vmem:[%s165 + $0x128] sm:$0xf]
      %v247 = vld [vmem:[%s165 + $0x12c] sm:$0xf]
      %v248 = vld [vmem:[%s165 + $0x130] sm:$0xf]
      %v249 = vld [vmem:[%s165 + $0x134] sm:$0xf]
      %v250 = vld [vmem:[%s165 + $0x138] sm:$0xf]
      %v251 = vld [vmem:[%s165 + $0x13c] sm:$0xf]
      %v252 = vld [vmem:[%s165 + $0x140] sm:$0xf]
      %v253 = vld [vmem:[%s165 + $0x144] sm:$0xf]
      %v254 = vld [vmem:[%s165 + $0x148] sm:$0xf]
      %v255 = vld [vmem:[%s165 + $0x14c] sm:$0xf]
      %v256 = vld [vmem:[%s165 + $0x150] sm:$0xf]
      %v257 = vld [vmem:[%s165 + $0x154] sm:$0xf]
      %v258 = vld [vmem:[%s165 + $0x158] sm:$0xf]
      %v259 = vld [vmem:[%s165 + $0x15c] sm:$0xf]
      %v260 = vld [vmem:[%s165 + $0x160] sm:$0xf]
      %v261 = vld [vmem:[%s165 + $0x164] sm:$0xf]
      %v262 = vld [vmem:[%s165 + $0x168] sm:$0xf]
      %v263 = vld [vmem:[%s165 + $0x16c] sm:$0xf]
      %v264 = vld [vmem:[%s165 + $0x170] sm:$0xf]
      %v265 = vld [vmem:[%s165 + $0x174] sm:$0xf]
      %v266 = vld [vmem:[%s165 + $0x178] sm:$0xf]
      %v267 = vld [vmem:[%s165 + $0x17c] sm:$0xf]
      %v268 = vld [vmem:[%s165 + $0x180] sm:$0xf]
      %v269 = vld [vmem:[%s165 + $0x184] sm:$0xf]
      %v270 = vld [vmem:[%s165 + $0x188] sm:$0xf]
      %v271 = vld [vmem:[%s165 + $0x18c] sm:$0xf]
      %v272 = vld [vmem:[%s165 + $0x190] sm:$0xf]
      %v273 = vld [vmem:[%s165 + $0x194] sm:$0xf]
      %v274 = vld [vmem:[%s165 + $0x198] sm:$0xf]
      %v275 = vld [vmem:[%s165 + $0x19c] sm:$0xf]
      %v276 = vld [vmem:[%s165 + $0x1a0] sm:$0xf]
      %v277 = vld [vmem:[%s165 + $0x1a4] sm:$0xf]
      %v278 = vld [vmem:[%s165 + $0x1a8] sm:$0xf]
      %v279 = vld [vmem:[%s165 + $0x1ac] sm:$0xf]
      %v280 = vld [vmem:[%s165 + $0x1b0] sm:$0xf]
      %v281 = vld [vmem:[%s165 + $0x1b4] sm:$0xf]
      %v282 = vld [vmem:[%s165 + $0x1b8] sm:$0xf]
      %v283 = vld [vmem:[%s165 + $0x1bc] sm:$0xf]
      %v284 = vld [vmem:[%s165 + $0x1c0] sm:$0xf]
      %v285 = vld [vmem:[%s165 + $0x1c4] sm:$0xf]
      %v286 = vld [vmem:[%s165 + $0x1c8] sm:$0xf]
      %v287 = vld [vmem:[%s165 + $0x1cc] sm:$0xf]
      %v288 = vld [vmem:[%s165 + $0x1d0] sm:$0xf]
      %v289 = vld [vmem:[%s165 + $0x1d4] sm:$0xf]
      %v290 = vld [vmem:[%s165 + $0x1d8] sm:$0xf]
      %v291 = vld [vmem:[%s165 + $0x1dc] sm:$0xf]
      %v292 = vld [vmem:[%s165 + $0x1e0] sm:$0xf]
      %v293 = vld [vmem:[%s165 + $0x1e4] sm:$0xf]
      %v294 = vld [vmem:[%s165 + $0x1e8] sm:$0xf]
      %v295 = vld [vmem:[%s165 + $0x1ec] sm:$0xf]
      %v296 = vld [vmem:[%s165 + $0x1f0] sm:$0xf]
      %v297 = vld [vmem:[%s165 + $0x1f4] sm:$0xf]
      %v298 = vld [vmem:[%s165 + $0x1f8] sm:$0xf]
      %v299 = vld [vmem:[%s165 + $0x1fc] sm:$0xf]
      %v300 = vld [vmem:[%s1] sm:$0xf]
      %v301 = vld [vmem:[%s1 + $0x4] sm:$0xf]
      %v302 = vld [vmem:[%s1 + $0x8] sm:$0xf]
      %v303 = vld [vmem:[%s1 + $0xc] sm:$0xf]
      %v304 = vld [vmem:[%s1 + $0x10] sm:$0xf]
      %v305 = vld [vmem:[%s1 + $0x14] sm:$0xf]
      %v306 = vld [vmem:[%s1 + $0x18] sm:$0xf]
      %v307 = vld [vmem:[%s1 + $0x1c] sm:$0xf]
      %v308 = vld [vmem:[%s1 + $0x20] sm:$0xf]
      %v309 = vld [vmem:[%s1 + $0x24] sm:$0xf]
      %v310 = vld [vmem:[%s1 + $0x28] sm:$0xf]
      %v311 = vld [vmem:[%s1 + $0x2c] sm:$0xf]
      %v312 = vld [vmem:[%s1 + $0x30] sm:$0xf]
      %v313 = vld [vmem:[%s1 + $0x34] sm:$0xf]
      %v314 = vld [vmem:[%s1 + $0x38] sm:$0xf]
      %v315 = vld [vmem:[%s1 + $0x3c] sm:$0xf]
      %v316 = vld [vmem:[%s2] sm:$0x1]
      %v318 = vlaneseq
      %v319 = vshrl.u32 %v318, 7
      %v320 = vsub.s32 0, %v319
      %v321 = vrot.slane %v316, %v320
      %v451 = vunpack.c.l.b16 %v172
      %v452 = vunpack.c.l.b16 %v173
      %v453 = vunpack.c.l.b16 %v174
      %v454 = vunpack.c.l.b16 %v175
      %v455 = vunpack.c.l.b16 %v176
      %v456 = vunpack.c.l.b16 %v177
      %v457 = vunpack.c.l.b16 %v178
      %v458 = vunpack.c.l.b16 %v179
      %v459 = vunpack.c.l.b16 %v180
      %v460 = vunpack.c.l.b16 %v181
      %v461 = vunpack.c.l.b16 %v182
      %v462 = vunpack.c.l.b16 %v183
      %v463 = vunpack.c.l.b16 %v184
      %v464 = vunpack.c.l.b16 %v185
      %v465 = vunpack.c.l.b16 %v186
      %v466 = vunpack.c.l.b16 %v187
      %v467 = vunpack.c.l.b16 %v188
      %v468 = vunpack.c.l.b16 %v189
      %v469 = vunpack.c.l.b16 %v190
      %v470 = vunpack.c.l.b16 %v191
      %v471 = vunpack.c.l.b16 %v192
      %v472 = vunpack.c.l.b16 %v193
      %v473 = vunpack.c.l.b16 %v194
      %v474 = vunpack.c.l.b16 %v195
      %v475 = vunpack.c.l.b16 %v196
      %v476 = vunpack.c.l.b16 %v197
      %v477 = vunpack.c.l.b16 %v198
      %v478 = vunpack.c.l.b16 %v199
      %v479 = vunpack.c.l.b16 %v200
      %v480 = vunpack.c.l.b16 %v201
      %v481 = vunpack.c.l.b16 %v202
      %v482 = vunpack.c.l.b16 %v203
      %v483 = vunpack.c.l.b16 %v204
      %v484 = vunpack.c.l.b16 %v205
      %v485 = vunpack.c.l.b16 %v206
      %v486 = vunpack.c.l.b16 %v207
      %v487 = vunpack.c.l.b16 %v208
      %v488 = vunpack.c.l.b16 %v209
      %v489 = vunpack.c.l.b16 %v210
      %v490 = vunpack.c.l.b16 %v211
      %v491 = vunpack.c.l.b16 %v212
      %v492 = vunpack.c.l.b16 %v213
      %v493 = vunpack.c.l.b16 %v214
      %v494 = vunpack.c.l.b16 %v215
      %v495 = vunpack.c.l.b16 %v216
      %v496 = vunpack.c.l.b16 %v217
      %v497 = vunpack.c.l.b16 %v218
      %v498 = vunpack.c.l.b16 %v219
      %v499 = vunpack.c.l.b16 %v220
      %v500 = vunpack.c.l.b16 %v221
      %v501 = vunpack.c.l.b16 %v222
      %v502 = vunpack.c.l.b16 %v223
      %v503 = vunpack.c.l.b16 %v224
      %v504 = vunpack.c.l.b16 %v225
      %v505 = vunpack.c.l.b16 %v226
      %v506 = vunpack.c.l.b16 %v227
      %v507 = vunpack.c.l.b16 %v228
      %v508 = vunpack.c.l.b16 %v229
      %v509 = vunpack.c.l.b16 %v230
      %v510 = vunpack.c.l.b16 %v231
      %v511 = vunpack.c.l.b16 %v232
      %v512 = vunpack.c.l.b16 %v233
      %v513 = vunpack.c.l.b16 %v234
      %v514 = vunpack.c.l.b16 %v235
      %v515 = vunpack.c.l.b16 %v236
      %v516 = vunpack.c.l.b16 %v237
      %v517 = vunpack.c.l.b16 %v238
      %v518 = vunpack.c.l.b16 %v239
      %v519 = vunpack.c.l.b16 %v240
      %v520 = vunpack.c.l.b16 %v241
      %v521 = vunpack.c.l.b16 %v242
      %v522 = vunpack.c.l.b16 %v243
      %v523 = vunpack.c.l.b16 %v244
      %v524 = vunpack.c.l.b16 %v245
      %v525 = vunpack.c.l.b16 %v246
      %v526 = vunpack.c.l.b16 %v247
      %v527 = vunpack.c.l.b16 %v248
      %v528 = vunpack.c.l.b16 %v249
      %v529 = vunpack.c.l.b16 %v250
      %v530 = vunpack.c.l.b16 %v251
      %v531 = vunpack.c.l.b16 %v252
      %v532 = vunpack.c.l.b16 %v253
      %v533 = vunpack.c.l.b16 %v254
      %v534 = vunpack.c.l.b16 %v255
      %v535 = vunpack.c.l.b16 %v256
      %v536 = vunpack.c.l.b16 %v257
      %v537 = vunpack.c.l.b16 %v258
      %v538 = vunpack.c.l.b16 %v259
      %v539 = vunpack.c.l.b16 %v260
      %v540 = vunpack.c.l.b16 %v261
      %v541 = vunpack.c.l.b16 %v262
      %v542 = vunpack.c.l.b16 %v263
      %v543 = vunpack.c.l.b16 %v264
      %v544 = vunpack.c.l.b16 %v265
      %v545 = vunpack.c.l.b16 %v266
      %v546 = vunpack.c.l.b16 %v267
      %v547 = vunpack.c.l.b16 %v268
      %v548 = vunpack.c.l.b16 %v269
      %v549 = vunpack.c.l.b16 %v270
      %v550 = vunpack.c.l.b16 %v271
      %v551 = vunpack.c.l.b16 %v272
      %v552 = vunpack.c.l.b16 %v273
      %v553 = vunpack.c.l.b16 %v274
      %v554 = vunpack.c.l.b16 %v275
      %v555 = vunpack.c.l.b16 %v276
      %v556 = vunpack.c.l.b16 %v277
      %v557 = vunpack.c.l.b16 %v278
      %v558 = vunpack.c.l.b16 %v279
      %v559 = vunpack.c.l.b16 %v280
      %v560 = vunpack.c.l.b16 %v281
      %v561 = vunpack.c.l.b16 %v282
      %v562 = vunpack.c.l.b16 %v283
      %v563 = vunpack.c.l.b16 %v284
      %v564 = vunpack.c.l.b16 %v285
      %v565 = vunpack.c.l.b16 %v286
      %v566 = vunpack.c.l.b16 %v287
      %v567 = vunpack.c.l.b16 %v288
      %v568 = vunpack.c.l.b16 %v289
      %v569 = vunpack.c.l.b16 %v290
      %v570 = vunpack.c.l.b16 %v291
      %v571 = vunpack.c.l.b16 %v292
      %v572 = vunpack.c.l.b16 %v293
      %v573 = vunpack.c.l.b16 %v294
      %v574 = vunpack.c.l.b16 %v295
      %v575 = vunpack.c.l.b16 %v296
      %v576 = vunpack.c.l.b16 %v297
      %v577 = vunpack.c.l.b16 %v298
      %v578 = vunpack.c.l.b16 %v299
      %v579 = vpack.c.b16 %v452, %v451
      %v580 = vpack.c.b16 %v454, %v453
      %v581 = vpack.c.b16 %v456, %v455
      %v582 = vpack.c.b16 %v458, %v457
      %v583 = vpack.c.b16 %v460, %v459
      %v584 = vpack.c.b16 %v462, %v461
      %v585 = vpack.c.b16 %v464, %v463
      %v586 = vpack.c.b16 %v466, %v465
      %v587 = vpack.c.b16 %v468, %v467
      %v588 = vpack.c.b16 %v470, %v469
      %v589 = vpack.c.b16 %v472, %v471
      %v590 = vpack.c.b16 %v474, %v473
      %v591 = vpack.c.b16 %v476, %v475
      %v592 = vpack.c.b16 %v478, %v477
      %v593 = vpack.c.b16 %v480, %v479
      %v594 = vpack.c.b16 %v482, %v481
      %v595 = vpack.c.b16 %v484, %v483
      %v596 = vpack.c.b16 %v486, %v485
      %v597 = vpack.c.b16 %v488, %v487
      %v598 = vpack.c.b16 %v490, %v489
      %v599 = vpack.c.b16 %v492, %v491
      %v600 = vpack.c.b16 %v494, %v493
      %v601 = vpack.c.b16 %v496, %v495
      %v602 = vpack.c.b16 %v498, %v497
      %v603 = vpack.c.b16 %v500, %v499
      %v604 = vpack.c.b16 %v502, %v501
      %v605 = vpack.c.b16 %v504, %v503
      %v606 = vpack.c.b16 %v506, %v505
      %v607 = vpack.c.b16 %v508, %v507
      %v608 = vpack.c.b16 %v510, %v509
      %v609 = vpack.c.b16 %v512, %v511
      %v610 = vpack.c.b16 %v514, %v513
      %v611 = vpack.c.b16 %v516, %v515
      %v612 = vpack.c.b16 %v518, %v517
      %v613 = vpack.c.b16 %v520, %v519
      %v614 = vpack.c.b16 %v522, %v521
      %v615 = vpack.c.b16 %v524, %v523
      %v616 = vpack.c.b16 %v526, %v525
      %v617 = vpack.c.b16 %v528, %v527
      %v618 = vpack.c.b16 %v530, %v529
      %v619 = vpack.c.b16 %v532, %v531
      %v620 = vpack.c.b16 %v534, %v533
      %v621 = vpack.c.b16 %v536, %v535
      %v622 = vpack.c.b16 %v538, %v537
      %v623 = vpack.c.b16 %v540, %v539
      %v624 = vpack.c.b16 %v542, %v541
      %v625 = vpack.c.b16 %v544, %v543
      %v626 = vpack.c.b16 %v546, %v545
      %v627 = vpack.c.b16 %v548, %v547
      %v628 = vpack.c.b16 %v550, %v549
      %v629 = vpack.c.b16 %v552, %v551
      %v630 = vpack.c.b16 %v554, %v553
      %v631 = vpack.c.b16 %v556, %v555
      %v632 = vpack.c.b16 %v558, %v557
      %v633 = vpack.c.b16 %v560, %v559
      %v634 = vpack.c.b16 %v562, %v561
      %v635 = vpack.c.b16 %v564, %v563
      %v636 = vpack.c.b16 %v566, %v565
      %v637 = vpack.c.b16 %v568, %v567
      %v638 = vpack.c.b16 %v570, %v569
      %v639 = vpack.c.b16 %v572, %v571
      %v640 = vpack.c.b16 %v574, %v573
      %v641 = vpack.c.b16 %v576, %v575
      %v642 = vpack.c.b16 %v578, %v577
      %v723 = vunpack.c.l.b16 %v300
      %v724 = vunpack.c.l.b16 %v301
      %v725 = vunpack.c.l.b16 %v302
      %v726 = vunpack.c.l.b16 %v303
      %v727 = vunpack.c.l.b16 %v304
      %v728 = vunpack.c.l.b16 %v305
      %v729 = vunpack.c.l.b16 %v306
      %v730 = vunpack.c.l.b16 %v307
      %v731 = vunpack.c.l.b16 %v308
      %v732 = vunpack.c.l.b16 %v309
      %v733 = vunpack.c.l.b16 %v310
      %v734 = vunpack.c.l.b16 %v311
      %v735 = vunpack.c.l.b16 %v312
      %v736 = vunpack.c.l.b16 %v313
      %v737 = vunpack.c.l.b16 %v314
      %v738 = vunpack.c.l.b16 %v315
      %v739 = vpack.c.b16 %v724, %v723
      %v740 = vpack.c.b16 %v726, %v725
      %v741 = vpack.c.b16 %v728, %v727
      %v742 = vpack.c.b16 %v730, %v729
      %v743 = vpack.c.b16 %v732, %v731
      %v744 = vpack.c.b16 %v734, %v733
      %v745 = vpack.c.b16 %v736, %v735
      %v746 = vpack.c.b16 %v738, %v737
      %755 = vmatprep.subr.bf16.mxu0 0
      %756 = vmatpush1.bf16.msra.mxu0 %v739
      %757 = vmatprep.subr.bf16.mxu0 0
      %758 = vmatpush1.bf16.msra.mxu0 %v740
      %759 = vmatprep.subr.bf16.mxu0 0
      %760 = vmatpush1.bf16.msra.mxu0 %v741
      %761 = vmatprep.subr.bf16.mxu0 0
      %762 = vmatpush1.bf16.msra.mxu0 %v742
      %763 = vmatprep.subr.bf16.mxu0 0
      %764 = vmatpush1.bf16.msra.mxu0 %v743
      %765 = vmatprep.subr.bf16.mxu0 0
      %766 = vmatpush1.bf16.msra.mxu0 %v744
      %767 = vmatprep.subr.bf16.mxu0 0
      %768 = vmatpush1.bf16.msra.mxu0 %v745
      %769 = vmatprep.subr.bf16.mxu0 0
      %770 = vmatpush1.bf16.msra.mxu0 %v746
      %771 = vmatprep.subr.bf16.mxu0 0
      %772 = vmatpush1.bf16.msra.mxu0 0
      %773 = vmatprep.subr.bf16.mxu0 0
      %774 = vmatpush1.bf16.msra.mxu0 0
      %775 = vmatprep.subr.bf16.mxu0 0
      %776 = vmatpush1.bf16.msra.mxu0 0
      %777 = vmatprep.subr.bf16.mxu0 0
      %778 = vmatpush1.bf16.msra.mxu0 0
      %779 = vmatprep.subr.bf16.mxu0 0
      %780 = vmatpush1.bf16.msra.mxu0 0
      %781 = vmatprep.subr.bf16.mxu0 0
      %782 = vmatpush1.bf16.msra.mxu0 0
      %783 = vmatprep.subr.bf16.mxu0 0
      %784 = vmatpush1.bf16.msra.mxu0 0
      %785 = vmatprep.subr.bf16.mxu0 0
      %786 = vmatpush1.bf16.msra.mxu0 0
      %787 = vmatprep.mubr.bf16.mxu0 0
      %788 = vmatmul.mubr.bf16.gmra.mrb[0].mxu0 %v579
      %v789 = vpop.f32.mrb[0].mxu0
      %v790 = vadd.f32 %v321, %v789
      %v791 = vpop.f32.mrb[0].mxu0
      %v792 = vpop.f32.mrb[0].mxu0
      %v793 = vadd.f32 %v321, %v792
      %v794 = vpop.f32.mrb[0].mxu0
      %795 = vmatprep.mubr.bf16.mxu0 0
      %796 = vmatmul.mubr.bf16.gmra.mrb[0].mxu0 %v580
      %v797 = vpop.f32.mrb[0].mxu0
      %v798 = vadd.f32 %v321, %v797
      %v799 = vpop.f32.mrb[0].mxu0
      %v800 = vpop.f32.mrb[0].mxu0
      %v801 = vadd.f32 %v321, %v800
      %v802 = vpop.f32.mrb[0].mxu0
      %803 = vmatprep.mubr.bf16.mxu0 0
      %804 = vmatmul.mubr.bf16.gmra.mrb[0].mxu0 %v581
      %v805 = vpop.f32.mrb[0].mxu0
      %v806 = vadd.f32 %v321, %v805
      %v807 = vpop.f32.mrb[0].mxu0
      %v808 = vpop.f32.mrb[0].mxu0
      %v809 = vadd.f32 %v321, %v808
      %v810 = vpop.f32.mrb[0].mxu0
      %811 = vmatprep.mubr.bf16.mxu0 0
      %812 = vmatmul.mubr.bf16.gmra.mrb[0].mxu0 %v582
      %v813 = vpop.f32.mrb[0].mxu0
      %v814 = vadd.f32 %v321, %v813
      %v815 = vpop.f32.mrb[0].mxu0
      %v816 = vpop.f32.mrb[0].mxu0
      %v817 = vadd.f32 %v321, %v816
      %v818 = vpop.f32.mrb[0].mxu0
      %819 = vmatprep.mubr.bf16.mxu0 0
      %820 = vmatmul.mubr.bf16.gmra.mrb[0].mxu0 %v583
      %v821 = vpop.f32.mrb[0].mxu0
      %v822 = vadd.f32 %v321, %v821
      %v823 = vpop.f32.mrb[0].mxu0
      %v824 = vpop.f32.mrb[0].mxu0
      %v825 = vadd.f32 %v321, %v824
      %v826 = vpop.f32.mrb[0].mxu0
      %827 = vmatprep.mubr.bf16.mxu0 0
      %828 = vmatmul.mubr.bf16.gmra.mrb[0].mxu0 %v584
      %v829 = vpop.f32.mrb[0].mxu0
      %v830 = vadd.f32 %v321, %v829
      %v831 = vpop.f32.mrb[0].mxu0
      %v832 = vpop.f32.mrb[0].mxu0
      %v833 = vadd.f32 %v321, %v832
      %v834 = vpop.f32.mrb[0].mxu0
      %835 = vmatprep.mubr.bf16.mxu0 0
      %836 = vmatmul.mubr.bf16.gmra.mrb[0].mxu0 %v585
      %v837 = vpop.f32.mrb[0].mxu0
      %v838 = vadd.f32 %v321, %v837
      %v839 = vpop.f32.mrb[0].mxu0
      %v840 = vpop.f32.mrb[0].mxu0
      %v841 = vadd.f32 %v321, %v840
      %v842 = vpop.f32.mrb[0].mxu0
      %843 = vmatprep.mubr.bf16.mxu0 0
      %844 = vmatmul.mubr.bf16.gmra.mrb[0].mxu0 %v586
      %v845 = vpop.f32.mrb[0].mxu0
      %v846 = vadd.f32 %v321, %v845
      %v847 = vpop.f32.mrb[0].mxu0
      %v848 = vpop.f32.mrb[0].mxu0
      %v849 = vadd.f32 %v321, %v848
      %v850 = vpop.f32.mrb[0].mxu0
      %851 = vmatprep.mubr.bf16.mxu0 0
      %852 = vmatmul.mubr.bf16.gmra.mrb[0].mxu0 %v587
      %v853 = vpop.f32.mrb[0].mxu0
      %v854 = vadd.f32 %v321, %v853
      %v855 = vpop.f32.mrb[0].mxu0
      %v856 = vpop.f32.mrb[0].mxu0
      %v857 = vadd.f32 %v321, %v856
      %v858 = vpop.f32.mrb[0].mxu0
      %859 = vmatprep.mubr.bf16.mxu0 0
      %860 = vmatmul.mubr.bf16.gmra.mrb[0].mxu0 %v588
      %v861 = vpop.f32.mrb[0].mxu0
      %v862 = vadd.f32 %v321, %v861
      %v863 = vpop.f32.mrb[0].mxu0
      %v864 = vpop.f32.mrb[0].mxu0
      %v865 = vadd.f32 %v321, %v864
      %v866 = vpop.f32.mrb[0].mxu0
      %867 = vmatprep.mubr.bf16.mxu0 0
      %868 = vmatmul.mubr.bf16.gmra.mrb[0].mxu0 %v589
      %v869 = vpop.f32.mrb[0].mxu0
      %v870 = vadd.f32 %v321, %v869
      %v871 = vpop.f32.mrb[0].mxu0
      %v872 = vpop.f32.mrb[0].mxu0
      %v873 = vadd.f32 %v321, %v872
      %v874 = vpop.f32.mrb[0].mxu0
      %875 = vmatprep.mubr.bf16.mxu0 0
      %876 = vmatmul.mubr.bf16.gmra.mrb[0].mxu0 %v590
      %v877 = vpop.f32.mrb[0].mxu0
      %v878 = vadd.f32 %v321, %v877
      %v879 = vpop.f32.mrb[0].mxu0
      %v880 = vpop.f32.mrb[0].mxu0
      %v881 = vadd.f32 %v321, %v880
      %v882 = vpop.f32.mrb[0].mxu0
      %883 = vmatprep.mubr.bf16.mxu0 0
      %884 = vmatmul.mubr.bf16.gmra.mrb[0].mxu0 %v591
      %v885 = vpop.f32.mrb[0].mxu0
      %v886 = vadd.f32 %v321, %v885
      %v887 = vpop.f32.mrb[0].mxu0
      %v888 = vpop.f32.mrb[0].mxu0
      %v889 = vadd.f32 %v321, %v888
      %v890 = vpop.f32.mrb[0].mxu0
      %891 = vmatprep.mubr.bf16.mxu0 0
      %892 = vmatmul.mubr.bf16.gmra.mrb[0].mxu0 %v592
      %v893 = vpop.f32.mrb[0].mxu0
      %v894 = vadd.f32 %v321, %v893
      %v895 = vpop.f32.mrb[0].mxu0
      %v896 = vpop.f32.mrb[0].mxu0
      %v897 = vadd.f32 %v321, %v896
      %v898 = vpop.f32.mrb[0].mxu0
      %899 = vmatprep.mubr.bf16.mxu0 0
      %900 = vmatmul.mubr.bf16.gmra.mrb[0].mxu0 %v593
      %v901 = vpop.f32.mrb[0].mxu0
      %v902 = vadd.f32 %v321, %v901
      %v903 = vpop.f32.mrb[0].mxu0
      %v904 = vpop.f32.mrb[0].mxu0
      %v905 = vadd.f32 %v321, %v904
      %v906 = vpop.f32.mrb[0].mxu0
      %907 = vmatprep.mubr.bf16.mxu0 0
      %908 = vmatmul.mubr.bf16.gmra.mrb[0].mxu0 %v594
      %v909 = vpop.f32.mrb[0].mxu0
      %v910 = vadd.f32 %v321, %v909
      %v911 = vpop.f32.mrb[0].mxu0
      %v912 = vpop.f32.mrb[0].mxu0
      %v913 = vadd.f32 %v321, %v912
      %v914 = vpop.f32.mrb[0].mxu0
      %915 = vmatprep.mubr.bf16.mxu0 0
      %916 = vmatmul.mubr.bf16.gmra.mrb[0].mxu0 %v595
      %v917 = vpop.f32.mrb[0].mxu0
      %v918 = vadd.f32 %v321, %v917
      %v919 = vpop.f32.mrb[0].mxu0
      %v920 = vpop.f32.mrb[0].mxu0
      %v921 = vadd.f32 %v321, %v920
      %v922 = vpop.f32.mrb[0].mxu0
      %923 = vmatprep.mubr.bf16.mxu0 0
      %924 = vmatmul.mubr.bf16.gmra.mrb[0].mxu0 %v596
      %v925 = vpop.f32.mrb[0].mxu0
      %v926 = vadd.f32 %v321, %v925
      %v927 = vpop.f32.mrb[0].mxu0
      %v928 = vpop.f32.mrb[0].mxu0
      %v929 = vadd.f32 %v321, %v928
      %v930 = vpop.f32.mrb[0].mxu0
      %931 = vmatprep.mubr.bf16.mxu0 0
      %932 = vmatmul.mubr.bf16.gmra.mrb[0].mxu0 %v597
      %v933 = vpop.f32.mrb[0].mxu0
      %v934 = vadd.f32 %v321, %v933
      %v935 = vpop.f32.mrb[0].mxu0
      %v936 = vpop.f32.mrb[0].mxu0
      %v937 = vadd.f32 %v321, %v936
      %v938 = vpop.f32.mrb[0].mxu0
      %939 = vmatprep.mubr.bf16.mxu0 0
      %940 = vmatmul.mubr.bf16.gmra.mrb[0].mxu0 %v598
      %v941 = vpop.f32.mrb[0].mxu0
      %v942 = vadd.f32 %v321, %v941
      %v943 = vpop.f32.mrb[0].mxu0
      %v944 = vpop.f32.mrb[0].mxu0
      %v945 = vadd.f32 %v321, %v944
      %v946 = vpop.f32.mrb[0].mxu0
      %947 = vmatprep.mubr.bf16.mxu0 0
      %948 = vmatmul.mubr.bf16.gmra.mrb[0].mxu0 %v599
      %v949 = vpop.f32.mrb[0].mxu0
      %v950 = vadd.f32 %v321, %v949
      %v951 = vpop.f32.mrb[0].mxu0
      %v952 = vpop.f32.mrb[0].mxu0
      %v953 = vadd.f32 %v321, %v952
      %v954 = vpop.f32.mrb[0].mxu0
      %955 = vmatprep.mubr.bf16.mxu0 0
      %956 = vmatmul.mubr.bf16.gmra.mrb[0].mxu0 %v600
      %v957 = vpop.f32.mrb[0].mxu0
      %v958 = vadd.f32 %v321, %v957
      %v959 = vpop.f32.mrb[0].mxu0
      %v960 = vpop.f32.mrb[0].mxu0
      %v961 = vadd.f32 %v321, %v960
      %v962 = vpop.f32.mrb[0].mxu0
      %963 = vmatprep.mubr.bf16.mxu0 0
      %964 = vmatmul.mubr.bf16.gmra.mrb[0].mxu0 %v601
      %v965 = vpop.f32.mrb[0].mxu0
      %v966 = vadd.f32 %v321, %v965
      %v967 = vpop.f32.mrb[0].mxu0
      %v968 = vpop.f32.mrb[0].mxu0
      %v969 = vadd.f32 %v321, %v968
      %v970 = vpop.f32.mrb[0].mxu0
      %971 = vmatprep.mubr.bf16.mxu0 0
      %972 = vmatmul.mubr.bf16.gmra.mrb[0].mxu0 %v602
      %v973 = vpop.f32.mrb[0].mxu0
      %v974 = vadd.f32 %v321, %v973
      %v975 = vpop.f32.mrb[0].mxu0
      %v976 = vpop.f32.mrb[0].mxu0
      %v977 = vadd.f32 %v321, %v976
      %v978 = vpop.f32.mrb[0].mxu0
      %979 = vmatprep.mubr.bf16.mxu0 0
      %980 = vmatmul.mubr.bf16.gmra.mrb[0].mxu0 %v603
      %v981 = vpop.f32.mrb[0].mxu0
      %v982 = vadd.f32 %v321, %v981
      %v983 = vpop.f32.mrb[0].mxu0
      %v984 = vpop.f32.mrb[0].mxu0
      %v985 = vadd.f32 %v321, %v984
      %v986 = vpop.f32.mrb[0].mxu0
      %987 = vmatprep.mubr.bf16.mxu0 0
      %988 = vmatmul.mubr.bf16.gmra.mrb[0].mxu0 %v604
      %v989 = vpop.f32.mrb[0].mxu0
      %v990 = vadd.f32 %v321, %v989
      %v991 = vpop.f32.mrb[0].mxu0
      %v992 = vpop.f32.mrb[0].mxu0
      %v993 = vadd.f32 %v321, %v992
      %v994 = vpop.f32.mrb[0].mxu0
      %995 = vmatprep.mubr.bf16.mxu0 0
      %996 = vmatmul.mubr.bf16.gmra.mrb[0].mxu0 %v605
      %v997 = vpop.f32.mrb[0].mxu0
      %v998 = vadd.f32 %v321, %v997
      %v999 = vpop.f32.mrb[0].mxu0
      %v1000 = vpop.f32.mrb[0].mxu0
      %v1001 = vadd.f32 %v321, %v1000
      %v1002 = vpop.f32.mrb[0].mxu0
      %1003 = vmatprep.mubr.bf16.mxu0 0
      %1004 = vmatmul.mubr.bf16.gmra.mrb[0].mxu0 %v606
      %v1005 = vpop.f32.mrb[0].mxu0
      %v1006 = vadd.f32 %v321, %v1005
      %v1007 = vpop.f32.mrb[0].mxu0
      %v1008 = vpop.f32.mrb[0].mxu0
      %v1009 = vadd.f32 %v321, %v1008
      %v1010 = vpop.f32.mrb[0].mxu0
      %1011 = vmatprep.mubr.bf16.mxu0 0
      %1012 = vmatmul.mubr.bf16.gmra.mrb[0].mxu0 %v607
      %v1013 = vpop.f32.mrb[0].mxu0
      %v1014 = vadd.f32 %v321, %v1013
      %v1015 = vpop.f32.mrb[0].mxu0
      %v1016 = vpop.f32.mrb[0].mxu0
      %v1017 = vadd.f32 %v321, %v1016
      %v1018 = vpop.f32.mrb[0].mxu0
      %1019 = vmatprep.mubr.bf16.mxu0 0
      %1020 = vmatmul.mubr.bf16.gmra.mrb[0].mxu0 %v608
      %v1021 = vpop.f32.mrb[0].mxu0
      %v1022 = vadd.f32 %v321, %v1021
      %v1023 = vpop.f32.mrb[0].mxu0
      %v1024 = vpop.f32.mrb[0].mxu0
      %v1025 = vadd.f32 %v321, %v1024
      %v1026 = vpop.f32.mrb[0].mxu0
      %1027 = vmatprep.mubr.bf16.mxu0 0
      %1028 = vmatmul.mubr.bf16.gmra.mrb[0].mxu0 %v609
      %v1029 = vpop.f32.mrb[0].mxu0
      %v1030 = vadd.f32 %v321, %v1029
      %v1031 = vpop.f32.mrb[0].mxu0
      %v1032 = vpop.f32.mrb[0].mxu0
      %v1033 = vadd.f32 %v321, %v1032
      %v1034 = vpop.f32.mrb[0].mxu0
      %1035 = vmatprep.mubr.bf16.mxu0 0
      %1036 = vmatmul.mubr.bf16.gmra.mrb[0].mxu0 %v610
      %v1037 = vpop.f32.mrb[0].mxu0
      %v1038 = vadd.f32 %v321, %v1037
      %v1039 = vpop.f32.mrb[0].mxu0
      %v1040 = vpop.f32.mrb[0].mxu0
      %v1041 = vadd.f32 %v321, %v1040
      %v1042 = vpop.f32.mrb[0].mxu0
      %1043 = vmatprep.mubr.bf16.mxu0 0
      %1044 = vmatmul.mubr.bf16.gmra.mrb[0].mxu0 %v611
      %v1045 = vpop.f32.mrb[0].mxu0
      %v1046 = vadd.f32 %v321, %v1045
      %v1047 = vpop.f32.mrb[0].mxu0
      %v1048 = vpop.f32.mrb[0].mxu0
      %v1049 = vadd.f32 %v321, %v1048
      %v1050 = vpop.f32.mrb[0].mxu0
      %1051 = vmatprep.mubr.bf16.mxu0 0
      %1052 = vmatmul.mubr.bf16.gmra.mrb[0].mxu0 %v612
      %v1053 = vpop.f32.mrb[0].mxu0
      %v1054 = vadd.f32 %v321, %v1053
      %v1055 = vpop.f32.mrb[0].mxu0
      %v1056 = vpop.f32.mrb[0].mxu0
      %v1057 = vadd.f32 %v321, %v1056
      %v1058 = vpop.f32.mrb[0].mxu0
      %1059 = vmatprep.mubr.bf16.mxu0 0
      %1060 = vmatmul.mubr.bf16.gmra.mrb[0].mxu0 %v613
      %v1061 = vpop.f32.mrb[0].mxu0
      %v1062 = vadd.f32 %v321, %v1061
      %v1063 = vpop.f32.mrb[0].mxu0
      %v1064 = vpop.f32.mrb[0].mxu0
      %v1065 = vadd.f32 %v321, %v1064
      %v1066 = vpop.f32.mrb[0].mxu0
      %1067 = vmatprep.mubr.bf16.mxu0 0
      %1068 = vmatmul.mubr.bf16.gmra.mrb[0].mxu0 %v614
      %v1069 = vpop.f32.mrb[0].mxu0
      %v1070 = vadd.f32 %v321, %v1069
      %v1071 = vpop.f32.mrb[0].mxu0
      %v1072 = vpop.f32.mrb[0].mxu0
      %v1073 = vadd.f32 %v321, %v1072
      %v1074 = vpop.f32.mrb[0].mxu0
      %1075 = vmatprep.mubr.bf16.mxu0 0
      %1076 = vmatmul.mubr.bf16.gmra.mrb[0].mxu0 %v615
      %v1077 = vpop.f32.mrb[0].mxu0
      %v1078 = vadd.f32 %v321, %v1077
      %v1079 = vpop.f32.mrb[0].mxu0
      %v1080 = vpop.f32.mrb[0].mxu0
      %v1081 = vadd.f32 %v321, %v1080
      %v1082 = vpop.f32.mrb[0].mxu0
      %1083 = vmatprep.mubr.bf16.mxu0 0
      %1084 = vmatmul.mubr.bf16.gmra.mrb[0].mxu0 %v616
      %v1085 = vpop.f32.mrb[0].mxu0
      %v1086 = vadd.f32 %v321, %v1085
      %v1087 = vpop.f32.mrb[0].mxu0
      %v1088 = vpop.f32.mrb[0].mxu0
      %v1089 = vadd.f32 %v321, %v1088
      %v1090 = vpop.f32.mrb[0].mxu0
      %1091 = vmatprep.mubr.bf16.mxu0 0
      %1092 = vmatmul.mubr.bf16.gmra.mrb[0].mxu0 %v617
      %v1093 = vpop.f32.mrb[0].mxu0
      %v1094 = vadd.f32 %v321, %v1093
      %v1095 = vpop.f32.mrb[0].mxu0
      %v1096 = vpop.f32.mrb[0].mxu0
      %v1097 = vadd.f32 %v321, %v1096
      %v1098 = vpop.f32.mrb[0].mxu0
      %1099 = vmatprep.mubr.bf16.mxu0 0
      %1100 = vmatmul.mubr.bf16.gmra.mrb[0].mxu0 %v618
      %v1101 = vpop.f32.mrb[0].mxu0
      %v1102 = vadd.f32 %v321, %v1101
      %v1103 = vpop.f32.mrb[0].mxu0
      %v1104 = vpop.f32.mrb[0].mxu0
      %v1105 = vadd.f32 %v321, %v1104
      %v1106 = vpop.f32.mrb[0].mxu0
      %1107 = vmatprep.mubr.bf16.mxu0 0
      %1108 = vmatmul.mubr.bf16.gmra.mrb[0].mxu0 %v619
      %v1109 = vpop.f32.mrb[0].mxu0
      %v1110 = vadd.f32 %v321, %v1109
      %v1111 = vpop.f32.mrb[0].mxu0
      %v1112 = vpop.f32.mrb[0].mxu0
      %v1113 = vadd.f32 %v321, %v1112
      %v1114 = vpop.f32.mrb[0].mxu0
      %1115 = vmatprep.mubr.bf16.mxu0 0
      %1116 = vmatmul.mubr.bf16.gmra.mrb[0].mxu0 %v620
      %v1117 = vpop.f32.mrb[0].mxu0
      %v1118 = vadd.f32 %v321, %v1117
      %v1119 = vpop.f32.mrb[0].mxu0
      %v1120 = vpop.f32.mrb[0].mxu0
      %v1121 = vadd.f32 %v321, %v1120
      %v1122 = vpop.f32.mrb[0].mxu0
      %1123 = vmatprep.mubr.bf16.mxu0 0
      %1124 = vmatmul.mubr.bf16.gmra.mrb[0].mxu0 %v621
      %v1125 = vpop.f32.mrb[0].mxu0
      %v1126 = vadd.f32 %v321, %v1125
      %v1127 = vpop.f32.mrb[0].mxu0
      %v1128 = vpop.f32.mrb[0].mxu0
      %v1129 = vadd.f32 %v321, %v1128
      %v1130 = vpop.f32.mrb[0].mxu0
      %1131 = vmatprep.mubr.bf16.mxu0 0
      %1132 = vmatmul.mubr.bf16.gmra.mrb[0].mxu0 %v622
      %v1133 = vpop.f32.mrb[0].mxu0
      %v1134 = vadd.f32 %v321, %v1133
      %v1135 = vpop.f32.mrb[0].mxu0
      %v1136 = vpop.f32.mrb[0].mxu0
      %v1137 = vadd.f32 %v321, %v1136
      %v1138 = vpop.f32.mrb[0].mxu0
      %1139 = vmatprep.mubr.bf16.mxu0 0
      %1140 = vmatmul.mubr.bf16.gmra.mrb[0].mxu0 %v623
      %v1141 = vpop.f32.mrb[0].mxu0
      %v1142 = vadd.f32 %v321, %v1141
      %v1143 = vpop.f32.mrb[0].mxu0
      %v1144 = vpop.f32.mrb[0].mxu0
      %v1145 = vadd.f32 %v321, %v1144
      %v1146 = vpop.f32.mrb[0].mxu0
      %1147 = vmatprep.mubr.bf16.mxu0 0
      %1148 = vmatmul.mubr.bf16.gmra.mrb[0].mxu0 %v624
      %v1149 = vpop.f32.mrb[0].mxu0
      %v1150 = vadd.f32 %v321, %v1149
      %v1151 = vpop.f32.mrb[0].mxu0
      %v1152 = vpop.f32.mrb[0].mxu0
      %v1153 = vadd.f32 %v321, %v1152
      %v1154 = vpop.f32.mrb[0].mxu0
      %1155 = vmatprep.mubr.bf16.mxu0 0
      %1156 = vmatmul.mubr.bf16.gmra.mrb[0].mxu0 %v625
      %v1157 = vpop.f32.mrb[0].mxu0
      %v1158 = vadd.f32 %v321, %v1157
      %v1159 = vpop.f32.mrb[0].mxu0
      %v1160 = vpop.f32.mrb[0].mxu0
      %v1161 = vadd.f32 %v321, %v1160
      %v1162 = vpop.f32.mrb[0].mxu0
      %1163 = vmatprep.mubr.bf16.mxu0 0
      %1164 = vmatmul.mubr.bf16.gmra.mrb[0].mxu0 %v626
      %v1165 = vpop.f32.mrb[0].mxu0
      %v1166 = vadd.f32 %v321, %v1165
      %v1167 = vpop.f32.mrb[0].mxu0
      %v1168 = vpop.f32.mrb[0].mxu0
      %v1169 = vadd.f32 %v321, %v1168
      %v1170 = vpop.f32.mrb[0].mxu0
      %1171 = vmatprep.mubr.bf16.mxu0 0
      %1172 = vmatmul.mubr.bf16.gmra.mrb[0].mxu0 %v627
      %v1173 = vpop.f32.mrb[0].mxu0
      %v1174 = vadd.f32 %v321, %v1173
      %v1175 = vpop.f32.mrb[0].mxu0
      %v1176 = vpop.f32.mrb[0].mxu0
      %v1177 = vadd.f32 %v321, %v1176
      %v1178 = vpop.f32.mrb[0].mxu0
      %1179 = vmatprep.mubr.bf16.mxu0 0
      %1180 = vmatmul.mubr.bf16.gmra.mrb[0].mxu0 %v628
      %v1181 = vpop.f32.mrb[0].mxu0
      %v1182 = vadd.f32 %v321, %v1181
      %v1183 = vpop.f32.mrb[0].mxu0
      %v1184 = vpop.f32.mrb[0].mxu0
      %v1185 = vadd.f32 %v321, %v1184
      %v1186 = vpop.f32.mrb[0].mxu0
      %1187 = vmatprep.mubr.bf16.mxu0 0
      %1188 = vmatmul.mubr.bf16.gmra.mrb[0].mxu0 %v629
      %v1189 = vpop.f32.mrb[0].mxu0
      %v1190 = vadd.f32 %v321, %v1189
      %v1191 = vpop.f32.mrb[0].mxu0
      %v1192 = vpop.f32.mrb[0].mxu0
      %v1193 = vadd.f32 %v321, %v1192
      %v1194 = vpop.f32.mrb[0].mxu0
      %1195 = vmatprep.mubr.bf16.mxu0 0
      %1196 = vmatmul.mubr.bf16.gmra.mrb[0].mxu0 %v630
      %v1197 = vpop.f32.mrb[0].mxu0
      %v1198 = vadd.f32 %v321, %v1197
      %v1199 = vpop.f32.mrb[0].mxu0
      %v1200 = vpop.f32.mrb[0].mxu0
      %v1201 = vadd.f32 %v321, %v1200
      %v1202 = vpop.f32.mrb[0].mxu0
      %1203 = vmatprep.mubr.bf16.mxu0 0
      %1204 = vmatmul.mubr.bf16.gmra.mrb[0].mxu0 %v631
      %v1205 = vpop.f32.mrb[0].mxu0
      %v1206 = vadd.f32 %v321, %v1205
      %v1207 = vpop.f32.mrb[0].mxu0
      %v1208 = vpop.f32.mrb[0].mxu0
      %v1209 = vadd.f32 %v321, %v1208
      %v1210 = vpop.f32.mrb[0].mxu0
      %1211 = vmatprep.mubr.bf16.mxu0 0
      %1212 = vmatmul.mubr.bf16.gmra.mrb[0].mxu0 %v632
      %v1213 = vpop.f32.mrb[0].mxu0
      %v1214 = vadd.f32 %v321, %v1213
      %v1215 = vpop.f32.mrb[0].mxu0
      %v1216 = vpop.f32.mrb[0].mxu0
      %v1217 = vadd.f32 %v321, %v1216
      %v1218 = vpop.f32.mrb[0].mxu0
      %1219 = vmatprep.mubr.bf16.mxu0 0
      %1220 = vmatmul.mubr.bf16.gmra.mrb[0].mxu0 %v633
      %v1221 = vpop.f32.mrb[0].mxu0
      %v1222 = vadd.f32 %v321, %v1221
      %v1223 = vpop.f32.mrb[0].mxu0
      %v1224 = vpop.f32.mrb[0].mxu0
      %v1225 = vadd.f32 %v321, %v1224
      %v1226 = vpop.f32.mrb[0].mxu0
      %1227 = vmatprep.mubr.bf16.mxu0 0
      %1228 = vmatmul.mubr.bf16.gmra.mrb[0].mxu0 %v634
      %v1229 = vpop.f32.mrb[0].mxu0
      %v1230 = vadd.f32 %v321, %v1229
      %v1231 = vpop.f32.mrb[0].mxu0
      %v1232 = vpop.f32.mrb[0].mxu0
      %v1233 = vadd.f32 %v321, %v1232
      %v1234 = vpop.f32.mrb[0].mxu0
      %1235 = vmatprep.mubr.bf16.mxu0 0
      %1236 = vmatmul.mubr.bf16.gmra.mrb[0].mxu0 %v635
      %v1237 = vpop.f32.mrb[0].mxu0
      %v1238 = vadd.f32 %v321, %v1237
      %v1239 = vpop.f32.mrb[0].mxu0
      %v1240 = vpop.f32.mrb[0].mxu0
      %v1241 = vadd.f32 %v321, %v1240
      %v1242 = vpop.f32.mrb[0].mxu0
      %1243 = vmatprep.mubr.bf16.mxu0 0
      %1244 = vmatmul.mubr.bf16.gmra.mrb[0].mxu0 %v636
      %v1245 = vpop.f32.mrb[0].mxu0
      %v1246 = vadd.f32 %v321, %v1245
      %v1247 = vpop.f32.mrb[0].mxu0
      %v1248 = vpop.f32.mrb[0].mxu0
      %v1249 = vadd.f32 %v321, %v1248
      %v1250 = vpop.f32.mrb[0].mxu0
      %1251 = vmatprep.mubr.bf16.mxu0 0
      %1252 = vmatmul.mubr.bf16.gmra.mrb[0].mxu0 %v637
      %v1253 = vpop.f32.mrb[0].mxu0
      %v1254 = vadd.f32 %v321, %v1253
      %v1255 = vpop.f32.mrb[0].mxu0
      %v1256 = vpop.f32.mrb[0].mxu0
      %v1257 = vadd.f32 %v321, %v1256
      %v1258 = vpop.f32.mrb[0].mxu0
      %1259 = vmatprep.mubr.bf16.mxu0 0
      %1260 = vmatmul.mubr.bf16.gmra.mrb[0].mxu0 %v638
      %v1261 = vpop.f32.mrb[0].mxu0
      %v1262 = vadd.f32 %v321, %v1261
      %v1263 = vpop.f32.mrb[0].mxu0
      %v1264 = vpop.f32.mrb[0].mxu0
      %v1265 = vadd.f32 %v321, %v1264
      %v1266 = vpop.f32.mrb[0].mxu0
      %1267 = vmatprep.mubr.bf16.mxu0 0
      %1268 = vmatmul.mubr.bf16.gmra.mrb[0].mxu0 %v639
      %v1269 = vpop.f32.mrb[0].mxu0
      %v1270 = vadd.f32 %v321, %v1269
      %v1271 = vpop.f32.mrb[0].mxu0
      %v1272 = vpop.f32.mrb[0].mxu0
      %v1273 = vadd.f32 %v321, %v1272
      %v1274 = vpop.f32.mrb[0].mxu0
      %1275 = vmatprep.mubr.bf16.mxu0 0
      %1276 = vmatmul.mubr.bf16.gmra.mrb[0].mxu0 %v640
      %v1277 = vpop.f32.mrb[0].mxu0
      %v1278 = vadd.f32 %v321, %v1277
      %v1279 = vpop.f32.mrb[0].mxu0
      %v1280 = vpop.f32.mrb[0].mxu0
      %v1281 = vadd.f32 %v321, %v1280
      %v1282 = vpop.f32.mrb[0].mxu0
      %1283 = vmatprep.mubr.bf16.mxu0 0
      %1284 = vmatmul.mubr.bf16.gmra.mrb[0].mxu0 %v641
      %v1285 = vpop.f32.mrb[0].mxu0
      %v1286 = vadd.f32 %v321, %v1285
      %v1287 = vpop.f32.mrb[0].mxu0
      %v1288 = vpop.f32.mrb[0].mxu0
      %v1289 = vadd.f32 %v321, %v1288
      %v1290 = vpop.f32.mrb[0].mxu0
      %1291 = vmatprep.mubr.bf16.mxu0 0
      %1292 = vmatmul.mubr.bf16.gmra.mrb[0].mxu0 %v642
      %v1293 = vpop.f32.mrb[0].mxu0
      %v1294 = vadd.f32 %v321, %v1293
      %v1295 = vpop.f32.mrb[0].mxu0
      %v1296 = vpop.f32.mrb[0].mxu0
      %v1297 = vadd.f32 %v321, %v1296
      %v1298 = vpop.f32.mrb[0].mxu0
      %1299 = vdwg.mxu0
      %v1300 = vtanh.pop %v790
      %v1301 = vtanh.pop %v793
      %v1302 = vtanh.pop %v798
      %v1303 = vtanh.pop %v801
      %v1304 = vtanh.pop %v806
      %v1305 = vtanh.pop %v809
      %v1306 = vtanh.pop %v814
      %v1307 = vtanh.pop %v817
      %v1308 = vtanh.pop %v822
      %v1309 = vtanh.pop %v825
      %v1310 = vtanh.pop %v830
      %v1311 = vtanh.pop %v833
      %v1312 = vtanh.pop %v838
      %v1313 = vtanh.pop %v841
      %v1314 = vtanh.pop %v846
      %v1315 = vtanh.pop %v849
      %v1316 = vtanh.pop %v854
      %v1317 = vtanh.pop %v857
      %v1318 = vtanh.pop %v862
      %v1319 = vtanh.pop %v865
      %v1320 = vtanh.pop %v870
      %v1321 = vtanh.pop %v873
      %v1322 = vtanh.pop %v878
      %v1323 = vtanh.pop %v881
      %v1324 = vtanh.pop %v886
      %v1325 = vtanh.pop %v889
      %v1326 = vtanh.pop %v894
      %v1327 = vtanh.pop %v897
      %v1328 = vtanh.pop %v902
      %v1329 = vtanh.pop %v905
      %v1330 = vtanh.pop %v910
      %v1331 = vtanh.pop %v913
      %v1332 = vtanh.pop %v918
      %v1333 = vtanh.pop %v921
      %v1334 = vtanh.pop %v926
      %v1335 = vtanh.pop %v929
      %v1336 = vtanh.pop %v934
      %v1337 = vtanh.pop %v937
      %v1338 = vtanh.pop %v942
      %v1339 = vtanh.pop %v945
      %v1340 = vtanh.pop %v950
      %v1341 = vtanh.pop %v953
      %v1342 = vtanh.pop %v958
      %v1343 = vtanh.pop %v961
      %v1344 = vtanh.pop %v966
      %v1345 = vtanh.pop %v969
      %v1346 = vtanh.pop %v974
      %v1347 = vtanh.pop %v977
      %v1348 = vtanh.pop %v982
      %v1349 = vtanh.pop %v985
      %v1350 = vtanh.pop %v990
      %v1351 = vtanh.pop %v993
      %v1352 = vtanh.pop %v998
      %v1353 = vtanh.pop %v1001
      %v1354 = vtanh.pop %v1006
      %v1355 = vtanh.pop %v1009
      %v1356 = vtanh.pop %v1014
      %v1357 = vtanh.pop %v1017
      %v1358 = vtanh.pop %v1022
      %v1359 = vtanh.pop %v1025
      %v1360 = vtanh.pop %v1030
      %v1361 = vtanh.pop %v1033
      %v1362 = vtanh.pop %v1038
      %v1363 = vtanh.pop %v1041
      %v1364 = vtanh.pop %v1046
      %v1365 = vtanh.pop %v1049
      %v1366 = vtanh.pop %v1054
      %v1367 = vtanh.pop %v1057
      %v1368 = vtanh.pop %v1062
      %v1369 = vtanh.pop %v1065
      %v1370 = vtanh.pop %v1070
      %v1371 = vtanh.pop %v1073
      %v1372 = vtanh.pop %v1078
      %v1373 = vtanh.pop %v1081
      %v1374 = vtanh.pop %v1086
      %v1375 = vtanh.pop %v1089
      %v1376 = vtanh.pop %v1094
      %v1377 = vtanh.pop %v1097
      %v1378 = vtanh.pop %v1102
      %v1379 = vtanh.pop %v1105
      %v1380 = vtanh.pop %v1110
      %v1381 = vtanh.pop %v1113
      %v1382 = vtanh.pop %v1118
      %v1383 = vtanh.pop %v1121
      %v1384 = vtanh.pop %v1126
      %v1385 = vtanh.pop %v1129
      %v1386 = vtanh.pop %v1134
      %v1387 = vtanh.pop %v1137
      %v1388 = vtanh.pop %v1142
      %v1389 = vtanh.pop %v1145
      %v1390 = vtanh.pop %v1150
      %v1391 = vtanh.pop %v1153
      %v1392 = vtanh.pop %v1158
      %v1393 = vtanh.pop %v1161
      %v1394 = vtanh.pop %v1166
      %v1395 = vtanh.pop %v1169
      %v1396 = vtanh.pop %v1174
      %v1397 = vtanh.pop %v1177
      %v1398 = vtanh.pop %v1182
      %v1399 = vtanh.pop %v1185
      %v1400 = vtanh.pop %v1190
      %v1401 = vtanh.pop %v1193
      %v1402 = vtanh.pop %v1198
      %v1403 = vtanh.pop %v1201
      %v1404 = vtanh.pop %v1206
      %v1405 = vtanh.pop %v1209
      %v1406 = vtanh.pop %v1214
      %v1407 = vtanh.pop %v1217
      %v1408 = vtanh.pop %v1222
      %v1409 = vtanh.pop %v1225
      %v1410 = vtanh.pop %v1230
      %v1411 = vtanh.pop %v1233
      %v1412 = vtanh.pop %v1238
      %v1413 = vtanh.pop %v1241
      %v1414 = vtanh.pop %v1246
      %v1415 = vtanh.pop %v1249
      %v1416 = vtanh.pop %v1254
      %v1417 = vtanh.pop %v1257
      %v1418 = vtanh.pop %v1262
      %v1419 = vtanh.pop %v1265
      %v1420 = vtanh.pop %v1270
      %v1421 = vtanh.pop %v1273
      %v1422 = vtanh.pop %v1278
      %v1423 = vtanh.pop %v1281
      %v1424 = vtanh.pop %v1286
      %v1425 = vtanh.pop %v1289
      %v1426 = vtanh.pop %v1294
      %v1427 = vtanh.pop %v1297
      %v1428 = vmax.f32 %v1300, %v1332
      %v1429 = vmax.f32 %v1301, %v1333
      %v1430 = vmax.f32 %v1302, %v1334
      %v1431 = vmax.f32 %v1303, %v1335
      %v1432 = vmax.f32 %v1304, %v1336
      %v1433 = vmax.f32 %v1305, %v1337
      %v1434 = vmax.f32 %v1306, %v1338
      %v1435 = vmax.f32 %v1307, %v1339
      %v1436 = vmax.f32 %v1308, %v1340
      %v1437 = vmax.f32 %v1309, %v1341
      %v1438 = vmax.f32 %v1310, %v1342
      %v1439 = vmax.f32 %v1311, %v1343
      %v1440 = vmax.f32 %v1312, %v1344
      %v1441 = vmax.f32 %v1313, %v1345
      %v1442 = vmax.f32 %v1314, %v1346
      %v1443 = vmax.f32 %v1315, %v1347
      %v1444 = vmax.f32 %v1316, %v1348
      %v1445 = vmax.f32 %v1317, %v1349
      %v1446 = vmax.f32 %v1318, %v1350
      %v1447 = vmax.f32 %v1319, %v1351
      %v1448 = vmax.f32 %v1320, %v1352
      %v1449 = vmax.f32 %v1321, %v1353
      %v1450 = vmax.f32 %v1322, %v1354
      %v1451 = vmax.f32 %v1323, %v1355
      %v1452 = vmax.f32 %v1324, %v1356
      %v1453 = vmax.f32 %v1325, %v1357
      %v1454 = vmax.f32 %v1326, %v1358
      %v1455 = vmax.f32 %v1327, %v1359
      %v1456 = vmax.f32 %v1328, %v1360
      %v1457 = vmax.f32 %v1329, %v1361
      %v1458 = vmax.f32 %v1330, %v1362
      %v1459 = vmax.f32 %v1331, %v1363
      %v1460 = vmax.f32 %v1364, %v1396
      %v1461 = vmax.f32 %v1365, %v1397
      %v1462 = vmax.f32 %v1366, %v1398
      %v1463 = vmax.f32 %v1367, %v1399
      %v1464 = vmax.f32 %v1368, %v1400
      %v1465 = vmax.f32 %v1369, %v1401
      %v1466 = vmax.f32 %v1370, %v1402
      %v1467 = vmax.f32 %v1371, %v1403
      %v1468 = vmax.f32 %v1372, %v1404
      %v1469 = vmax.f32 %v1373, %v1405
      %v1470 = vmax.f32 %v1374, %v1406
      %v1471 = vmax.f32 %v1375, %v1407
      %v1472 = vmax.f32 %v1376, %v1408
      %v1473 = vmax.f32 %v1377, %v1409
      %v1474 = vmax.f32 %v1378, %v1410
      %v1475 = vmax.f32 %v1379, %v1411
      %v1476 = vmax.f32 %v1380, %v1412
      %v1477 = vmax.f32 %v1381, %v1413
      %v1478 = vmax.f32 %v1382, %v1414
      %v1479 = vmax.f32 %v1383, %v1415
      %v1480 = vmax.f32 %v1384, %v1416
      %v1481 = vmax.f32 %v1385, %v1417
      %v1482 = vmax.f32 %v1386, %v1418
      %v1483 = vmax.f32 %v1387, %v1419
      %v1484 = vmax.f32 %v1388, %v1420
      %v1485 = vmax.f32 %v1389, %v1421
      %v1486 = vmax.f32 %v1390, %v1422
      %v1487 = vmax.f32 %v1391, %v1423
      %v1488 = vmax.f32 %v1392, %v1424
      %v1489 = vmax.f32 %v1393, %v1425
      %v1490 = vmax.f32 %v1394, %v1426
      %v1491 = vmax.f32 %v1395, %v1427
      %v1492 = vmax.f32 %v1428, %v1460
      %v1493 = vmax.f32 %v1429, %v1461
      %v1494 = vmax.f32 %v1430, %v1462
      %v1495 = vmax.f32 %v1431, %v1463
      %v1496 = vmax.f32 %v1432, %v1464
      %v1497 = vmax.f32 %v1433, %v1465
      %v1498 = vmax.f32 %v1434, %v1466
      %v1499 = vmax.f32 %v1435, %v1467
      %v1500 = vmax.f32 %v1436, %v1468
      %v1501 = vmax.f32 %v1437, %v1469
      %v1502 = vmax.f32 %v1438, %v1470
      %v1503 = vmax.f32 %v1439, %v1471
      %v1504 = vmax.f32 %v1440, %v1472
      %v1505 = vmax.f32 %v1441, %v1473
      %v1506 = vmax.f32 %v1442, %v1474
      %v1507 = vmax.f32 %v1443, %v1475
      %v1508 = vmax.f32 %v1444, %v1476
      %v1509 = vmax.f32 %v1445, %v1477
      %v1510 = vmax.f32 %v1446, %v1478
      %v1511 = vmax.f32 %v1447, %v1479
      %v1512 = vmax.f32 %v1448, %v1480
      %v1513 = vmax.f32 %v1449, %v1481
      %v1514 = vmax.f32 %v1450, %v1482
      %v1515 = vmax.f32 %v1451, %v1483
      %v1516 = vmax.f32 %v1452, %v1484
      %v1517 = vmax.f32 %v1453, %v1485
      %v1518 = vmax.f32 %v1454, %v1486
      %v1519 = vmax.f32 %v1455, %v1487
      %v1520 = vmax.f32 %v1456, %v1488
      %v1521 = vmax.f32 %v1457, %v1489
      %v1522 = vmax.f32 %v1458, %v1490
      %v1523 = vmax.f32 %v1459, %v1491
      %1524 = vst [vmem:[%s170] sm:$0xff] %v1492
      %1525 = vst [vmem:[%s170 + $0x8] sm:$0xff] %v1493
      %1526 = vst [vmem:[%s170 + $0x10] sm:$0xff] %v1494
      %1527 = vst [vmem:[%s170 + $0x18] sm:$0xff] %v1495
      %1528 = vst [vmem:[%s170 + $0x20] sm:$0xff] %v1496
      %1529 = vst [vmem:[%s170 + $0x28] sm:$0xff] %v1497
      %1530 = vst [vmem:[%s170 + $0x30] sm:$0xff] %v1498
      %1531 = vst [vmem:[%s170 + $0x38] sm:$0xff] %v1499
      %1532 = vst [vmem:[%s170 + $0x40] sm:$0xff] %v1500
      %1533 = vst [vmem:[%s170 + $0x48] sm:$0xff] %v1501
      %1534 = vst [vmem:[%s170 + $0x50] sm:$0xff] %v1502
      %1535 = vst [vmem:[%s170 + $0x58] sm:$0xff] %v1503
      %1536 = vst [vmem:[%s170 + $0x60] sm:$0xff] %v1504
      %1537 = vst [vmem:[%s170 + $0x68] sm:$0xff] %v1505
      %1538 = vst [vmem:[%s170 + $0x70] sm:$0xff] %v1506
      %1539 = vst [vmem:[%s170 + $0x78] sm:$0xff] %v1507
      %1540 = vst [vmem:[%s170 + $0x80] sm:$0xff] %v1508
      %1541 = vst [vmem:[%s170 + $0x88] sm:$0xff] %v1509
      %1542 = vst [vmem:[%s170 + $0x90] sm:$0xff] %v1510
      %1543 = vst [vmem:[%s170 + $0x98] sm:$0xff] %v1511
      %1544 = vst [vmem:[%s170 + $0xa0] sm:$0xff] %v1512
      %1545 = vst [vmem:[%s170 + $0xa8] sm:$0xff] %v1513
      %1546 = vst [vmem:[%s170 + $0xb0] sm:$0xff] %v1514
      %1547 = vst [vmem:[%s170 + $0xb8] sm:$0xff] %v1515
      %1548 = vst [vmem:[%s170 + $0xc0] sm:$0xff] %v1516
      %1549 = vst [vmem:[%s170 + $0xc8] sm:$0xff] %v1517
      %1550 = vst [vmem:[%s170 + $0xd0] sm:$0xff] %v1518
      %1551 = vst [vmem:[%s170 + $0xd8] sm:$0xff] %v1519
      %1552 = vst [vmem:[%s170 + $0xe0] sm:$0xff] %v1520
      %1553 = vst [vmem:[%s170 + $0xe8] sm:$0xff] %v1521
      %1554 = vst [vmem:[%s170 + $0xf0] sm:$0xff] %v1522
      %1555 = vst [vmem:[%s170 + $0xf8] sm:$0xff] %v1523
      %p1556 = scmp.lt.s32.totalorder %s14, 1
      %s1557 = scalar_select %p1556, %s14, 1
      %s1558 = smul.addr %s1557, 32
      %s1559 = smul.addr %s1558, 8
      %s1560 = scalar_lea.vmem %s3, %s1559
      // Predicated region
      $region33: #{lenet5_forward.3} parent=31 // pred_check
        %p1561 = pneg %p100
      $region34: #{lenet5_forward.3} parent=31 // pred_check_branch
        %1563 = sbr.rel (%p1561) target = $region36
      $region35: #{lenet5_forward.3} parent=31 // pred_region
        _
      $region36: #{lenet5_forward.3} parent=31 // pred_fallthru
        _
    $region32: #{lenet5_forward.3} parent=5 // pred_fallthru
      _
    %p1564 = scmp.le.s32.totalorder 2, %s9
    // Predicated region
    $region37: #{lenet5_forward.3} parent=5 // pred_check
      %p1565 = pneg %p1564
    $region38: #{lenet5_forward.3} parent=5 // pred_check_branch
      %1567 = sbr.rel (%p1565) target = $region40
    $region39: #{lenet5_forward.3} parent=5 // pred_region
      %s1568 = ssub.s32 %s9, 2
      // Predicated region
      $region41: #{lenet5_forward.3} parent=39 // pred_check
        %p1569 = pneg %p106
      $region42: #{lenet5_forward.3} parent=39 // pred_check_branch
        %1571 = sbr.rel (%p1569) target = $region44
      $region43: #{lenet5_forward.3} parent=39 // pred_region
        %p1572 = scmp.lt.s32.totalorder %s15, 1
        %s1573 = scalar_select %p1572, %s15, 1
        %s1574 = smul.addr %s1573, 32
        %s1575 = smul.addr %s1574, 8
        %s1576 = scalar_lea.vmem %s3, %s1575
      $region44: #{lenet5_forward.3} parent=39 // pred_fallthru
        _
    $region40: #{lenet5_forward.3} parent=5 // pred_fallthru
      _
  $region6: #{lenet5_forward.3} parent=0 // loop_footer
    %s13 = sadd.s32 1, %s9
  $region7: #{lenet5_forward.3} parent=0 // loop_footer_branch
    %8 = sbr.rel target = $region3
  $region8: #{lenet5_forward.3} parent=0 // loop_exit
    _

// kernel: lenet5_forward.4
$region0: #{lenet5_forward.4}
  #allocation0 [shape = 'u32[]', space=smem, size = 0x4, offset = 0x4, fixed_abs, tag = 'smem constant byte address 0x4 - core index']
  #allocation1 [shape = 'u32[144,128]{1,0:T(1,128)}', space=vmem, size = 0x12000, scoped, tag = 'internal scratch']
  %s0 = inlined_call_operand.vmem [shape: bf16[2,160,256], index: 0, kind: input, shape index: {}]
  %s1 = inlined_call_operand.vmem [shape: bf16[256,128], index: 1, kind: input, shape index: {}]
  %s2 = inlined_call_operand.vmem [shape: f32[1,128], index: 2, kind: input, shape index: {}]
  %s3 = inlined_call_operand.vmem [shape: f32[2,40,128], index: 3, kind: output, shape index: {}]
  %s4 = sld [smem:[#allocation0]]
  $region45: #{lenet5_forward.4} parent=0
    _
  %s6 = ssub.s32 1, %s4
  %s7 = scalar_select 0, %s6, %s4
  loop: start=0, step=1, limit=4
  $region2: #{lenet5_forward.4} parent=0 // loop_pre_header
    _
  $region3: #{lenet5_forward.4} parent=0 // loop_header
    %s9 = sphi 0, %s13
    %p10 = scmp.ge.s32.totalorder %s9, 4
    %s19 = sphi 0, %s21
    %s22 = sphi 0, %s19
    %s23 = sphi 0, %s22
    %s39 = sphi 0, %s23
    %s43 = sphi 0, %s43
    %s45 = sphi 0, %s43
    %s46 = sphi 0, %s45
    %s60 = sphi 0, %s46
    %s64 = sphi 0, %s64
    %s66 = sphi 0, %s64
    %s67 = sphi 0, %s66
    %s81 = sphi 0, %s67
    %s87 = sphi 0, %s89
    %s90 = sphi 0, %s87
    %s91 = sphi 0, %s90
    %s107 = sphi 0, %s91
  $region4: #{lenet5_forward.4} parent=0 // loop_header_branch
    %12 = sbr.rel (%p10) target = $region8
  $region5: #{lenet5_forward.4} parent=0 // loop_body
    %s14 = ssub.s32 %s9, 1
    %s15 = ssub.s32 %s9, 2
    %s16 = sadd.s32 %s9, 1
    %s17 = ssub.s32 %s9, %s16
    %p18 = scmp.eq.s32.totalorder %s17, 0
    %s20 = sadd.s32 %s19, 1
    %s21 = scalar_select %p18, %s19, %s20
    %p24 = pneg %p18
    %p25 = scmp.eq.s32.totalorder %s9, 1
    %p26 = por %p24, %p25
    %p27 = scmp.ne.s32.totalorder %s19, %s22
    %p28 = scmp.eq.s32.totalorder %s9, 0
    %p29 = por %p27, %p28
    %p30 = scmp.ne.s32.totalorder %s19, %s22
    %p31 = scmp.eq.s32.totalorder %s14, 1
    %p32 = por %p30, %p31
    %p33 = scmp.ne.s32.totalorder %s22, %s23
    %p34 = scmp.eq.s32.totalorder %s14, 0
    %p35 = por %p33, %p34
    %p36 = scmp.ne.s32.totalorder %s22, %s23
    %p37 = scmp.eq.s32.totalorder %s15, 1
    %p38 = por %p36, %p37
    %p40 = scmp.ne.s32.totalorder %s23, %s39
    %p41 = scmp.eq.s32.totalorder %s15, 0
    %p42 = por %p40, %p41
    %s44 = sadd.s32 %s43, 1
    %p47 = scmp.eq.s32.totalorder %s9, 1
    %p48 = scmp.ne.s32.totalorder %s43, %s45
    %p49 = scmp.eq.s32.totalorder %s9, 0
    %p50 = por %p48, %p49
    %p51 = scmp.ne.s32.totalorder %s43, %s45
    %p52 = scmp.eq.s32.totalorder %s14, 1
    %p53 = por %p51, %p52
    %p54 = scmp.ne.s32.totalorder %s45, %s46
    %p55 = scmp.eq.s32.totalorder %s14, 0
    %p56 = por %p54, %p55
    %p57 = scmp.ne.s32.totalorder %s45, %s46
    %p58 = scmp.eq.s32.totalorder %s15, 1
    %p59 = por %p57, %p58
    %p61 = scmp.ne.s32.totalorder %s46, %s60
    %p62 = scmp.eq.s32.totalorder %s15, 0
    %p63 = por %p61, %p62
    %s65 = sadd.s32 %s64, 1
    %p68 = scmp.eq.s32.totalorder %s9, 1
    %p69 = scmp.ne.s32.totalorder %s64, %s66
    %p70 = scmp.eq.s32.totalorder %s9, 0
    %p71 = por %p69, %p70
    %p72 = scmp.ne.s32.totalorder %s64, %s66
    %p73 = scmp.eq.s32.totalorder %s14, 1
    %p74 = por %p72, %p73
    %p75 = scmp.ne.s32.totalorder %s66, %s67
    %p76 = scmp.eq.s32.totalorder %s14, 0
    %p77 = por %p75, %p76
    %p78 = scmp.ne.s32.totalorder %s66, %s67
    %p79 = scmp.eq.s32.totalorder %s15, 1
    %p80 = por %p78, %p79
    %p82 = scmp.ne.s32.totalorder %s67, %s81
    %p83 = scmp.eq.s32.totalorder %s15, 0
    %p84 = por %p82, %p83
    %s85 = ssub.s32 %s9, %s16
    %p86 = scmp.eq.s32.totalorder %s85, 0
    %s88 = sadd.s32 %s87, 1
    %s89 = scalar_select %p86, %s87, %s88
    %p92 = pneg %p86
    %p93 = scmp.eq.s32.totalorder %s9, 1
    %p94 = por %p92, %p93
    %p95 = scmp.ne.s32.totalorder %s87, %s90
    %p96 = scmp.eq.s32.totalorder %s9, 0
    %p97 = por %p95, %p96
    %p98 = scmp.ne.s32.totalorder %s87, %s90
    %p99 = scmp.eq.s32.totalorder %s14, 1
    %p100 = por %p98, %p99
    %p101 = scmp.ne.s32.totalorder %s90, %s91
    %p102 = scmp.eq.s32.totalorder %s14, 0
    %p103 = por %p101, %p102
    %p104 = scmp.ne.s32.totalorder %s90, %s91
    %p105 = scmp.eq.s32.totalorder %s15, 1
    %p106 = por %p104, %p105
    %p108 = scmp.ne.s32.totalorder %s91, %s107
    %p109 = scmp.eq.s32.totalorder %s15, 0
    %p110 = por %p108, %p109
    %p111 = scmp.le.s32.totalorder 1, %s9
    %p112 = scmp.lt.s32.totalorder %s9, 3
    %p113 = pnand %p111, %p112
    %p114 = pneg %p113
    // Predicated region
    $region9: #{lenet5_forward.4} parent=5 // pred_check
      _
    $region10: #{lenet5_forward.4} parent=5 // pred_check_branch
      %116 = sbr.rel (%p113) target = $region12
    $region11: #{lenet5_forward.4} parent=5 // pred_region
      %s117 = ssub.s32 %s9, 1
      // Predicated region
      $region13: #{lenet5_forward.4} parent=11 // pred_check
        %p118 = pneg %p56
      $region14: #{lenet5_forward.4} parent=11 // pred_check_branch
        %120 = sbr.rel (%p118) target = $region16
      $region15: #{lenet5_forward.4} parent=11 // pred_region
        _
      $region16: #{lenet5_forward.4} parent=11 // pred_fallthru
        _
      // Predicated region
      $region17: #{lenet5_forward.4} parent=11 // pred_check
        %p121 = pneg %p77
      $region18: #{lenet5_forward.4} parent=11 // pred_check_branch
        %123 = sbr.rel (%p121) target = $region20
      $region19: #{lenet5_forward.4} parent=11 // pred_region
        _
      $region20: #{lenet5_forward.4} parent=11 // pred_fallthru
        _
    $region12: #{lenet5_forward.4} parent=5 // pred_fallthru
      _
    %p124 = scmp.lt.s32.totalorder %s9, 2
    // Predicated region
    $region21: #{lenet5_forward.4} parent=5 // pred_check
      %p125 = pneg %p124
    $region22: #{lenet5_forward.4} parent=5 // pred_check_branch
      %127 = sbr.rel (%p125) target = $region24
    $region23: #{lenet5_forward.4} parent=5 // pred_region
      // Predicated region
      $region25: #{lenet5_forward.4} parent=23 // pred_check
        %p128 = pneg %p29
      $region26: #{lenet5_forward.4} parent=23 // pred_check_branch
        %130 = sbr.rel (%p128) target = $region28
      $region27: #{lenet5_forward.4} parent=23 // pred_region
        %p131 = scmp.lt.s32.totalorder %s9, 1
        %s132 = scalar_select %p131, %s9, 1
        %s133 = smul.addr %s132, 40
        %s134 = smul.addr %s133, 4
        %s135 = scalar_lea.vmem %s0, %s134
      $region28: #{lenet5_forward.4} parent=23 // pred_fallthru
        _
    $region24: #{lenet5_forward.4} parent=5 // pred_fallthru
      _
    %p136 = scmp.le.s32.totalorder 1, %s9
    %p137 = scmp.lt.s32.totalorder %s9, 3
    %p138 = pnand %p136, %p137
    %p139 = pneg %p138
    // Predicated region
    $region29: #{lenet5_forward.4} parent=5 // pred_check
      _
    $region30: #{lenet5_forward.4} parent=5 // pred_check_branch
      %141 = sbr.rel (%p138) target = $region32
    $region31: #{lenet5_forward.4} parent=5 // pred_region
      %s142 = ssub.s32 %s9, 1
      %p143 = scmp.lt.s32.totalorder %s14, 1
      %s144 = scalar_select %p143, %s14, 1
      %s145 = smul.addr %s144, 40
      %s146 = smul.addr %s145, 4
      %s147 = scalar_lea.vmem %s0, %s146
      %p148 = pneg %p35
      %p149 = pneg %p32
      %p150 = pneg %p56
      %p151 = pneg %p53
      %p152 = pneg %p77
      %p153 = pneg %p74
      %p154 = pneg %p103
      %p155 = pneg %p100
      %p156 = scmp.lt.s32.totalorder %s14, 1
      %s157 = scalar_select %p156, %s14, 1
      %s158 = smul.addr %s157, 5
      %s159 = smul.addr %s158, 8
      %s160 = scalar_lea.vmem %s3, %s159
      %p161 = scmp.lt.s32.totalorder %s14, 1
      %s162 = scalar_select %p161, %s14, 1
      %s163 = smul.addr %s162, 40
      %s164 = smul.addr %s163, 4
      %s165 = scalar_lea.vmem %s0, %s164
      %p166 = scmp.lt.s32.totalorder %s14, 1
      %s167 = scalar_select %p166, %s14, 1
      %s168 = smul.addr %s167, 5
      %s169 = smul.addr %s168, 8
      %s170 = scalar_lea.vmem %s3, %s169
      %v172 = vld [vmem:[%s165] sm:$0xff]
      %v173 = vld [vmem:[%s165 + $0x8] sm:$0xff]
      %v174 = vld [vmem:[%s165 + $0x10] sm:$0xff]
      %v175 = vld [vmem:[%s165 + $0x18] sm:$0xff]
      %v176 = vld [vmem:[%s165 + $0x20] sm:$0xff]
      %v177 = vld [vmem:[%s165 + $0x28] sm:$0xff]
      %v178 = vld [vmem:[%s165 + $0x30] sm:$0xff]
      %v179 = vld [vmem:[%s165 + $0x38] sm:$0xff]
      %v180 = vld [vmem:[%s165 + $0x40] sm:$0xff]
      %v181 = vld [vmem:[%s165 + $0x48] sm:$0xff]
      %v182 = vld [vmem:[%s165 + $0x50] sm:$0xff]
      %v183 = vld [vmem:[%s165 + $0x58] sm:$0xff]
      %v184 = vld [vmem:[%s165 + $0x60] sm:$0xff]
      %v185 = vld [vmem:[%s165 + $0x68] sm:$0xff]
      %v186 = vld [vmem:[%s165 + $0x70] sm:$0xff]
      %v187 = vld [vmem:[%s165 + $0x78] sm:$0xff]
      %v188 = vld [vmem:[%s165 + $0x80] sm:$0xff]
      %v189 = vld [vmem:[%s165 + $0x88] sm:$0xff]
      %v190 = vld [vmem:[%s165 + $0x90] sm:$0xff]
      %v191 = vld [vmem:[%s165 + $0x98] sm:$0xff]
      %v192 = vld [vmem:[%s1] sm:$0xf]
      %v193 = vld [vmem:[%s1 + $0x4] sm:$0xf]
      %v194 = vld [vmem:[%s1 + $0x8] sm:$0xf]
      %v195 = vld [vmem:[%s1 + $0xc] sm:$0xf]
      %v196 = vld [vmem:[%s1 + $0x10] sm:$0xf]
      %v197 = vld [vmem:[%s1 + $0x14] sm:$0xf]
      %v198 = vld [vmem:[%s1 + $0x18] sm:$0xf]
      %v199 = vld [vmem:[%s1 + $0x1c] sm:$0xf]
      %v200 = vld [vmem:[%s1 + $0x20] sm:$0xf]
      %v201 = vld [vmem:[%s1 + $0x24] sm:$0xf]
      %v202 = vld [vmem:[%s1 + $0x28] sm:$0xf]
      %v203 = vld [vmem:[%s1 + $0x2c] sm:$0xf]
      %v204 = vld [vmem:[%s1 + $0x30] sm:$0xf]
      %v205 = vld [vmem:[%s1 + $0x34] sm:$0xf]
      %v206 = vld [vmem:[%s1 + $0x38] sm:$0xf]
      %v207 = vld [vmem:[%s1 + $0x3c] sm:$0xf]
      %v208 = vld [vmem:[%s1 + $0x40] sm:$0xf]
      %v209 = vld [vmem:[%s1 + $0x44] sm:$0xf]
      %v210 = vld [vmem:[%s1 + $0x48] sm:$0xf]
      %v211 = vld [vmem:[%s1 + $0x4c] sm:$0xf]
      %v212 = vld [vmem:[%s1 + $0x50] sm:$0xf]
      %v213 = vld [vmem:[%s1 + $0x54] sm:$0xf]
      %v214 = vld [vmem:[%s1 + $0x58] sm:$0xf]
      %v215 = vld [vmem:[%s1 + $0x5c] sm:$0xf]
      %v216 = vld [vmem:[%s1 + $0x60] sm:$0xf]
      %v217 = vld [vmem:[%s1 + $0x64] sm:$0xf]
      %v218 = vld [vmem:[%s1 + $0x68] sm:$0xf]
      %v219 = vld [vmem:[%s1 + $0x6c] sm:$0xf]
      %v220 = vld [vmem:[%s1 + $0x70] sm:$0xf]
      %v221 = vld [vmem:[%s1 + $0x74] sm:$0xf]
      %v222 = vld [vmem:[%s1 + $0x78] sm:$0xf]
      %v223 = vld [vmem:[%s1 + $0x7c] sm:$0xf]
      %v224 = vld [vmem:[%s2] sm:$0x1]
      %v226 = vlaneseq
      %v227 = vshrl.u32 %v226, 7
      %v228 = vsub.s32 0, %v227
      %v229 = vrot.slane %v224, %v228
      %v251 = vunpack.c.l.b16 %v172
      %v252 = vunpack.c.h.b16 %v172
      %v253 = vunpack.c.l.b16 %v173
      %v254 = vunpack.c.h.b16 %v173
      %v255 = vunpack.c.l.b16 %v174
      %v256 = vunpack.c.h.b16 %v174
      %v257 = vunpack.c.l.b16 %v175
      %v258 = vunpack.c.h.b16 %v175
      %v259 = vunpack.c.l.b16 %v176
      %v260 = vunpack.c.h.b16 %v176
      %v261 = vunpack.c.l.b16 %v177
      %v262 = vunpack.c.h.b16 %v177
      %v263 = vunpack.c.l.b16 %v178
      %v264 = vunpack.c.h.b16 %v178
      %v265 = vunpack.c.l.b16 %v179
      %v266 = vunpack.c.h.b16 %v179
      %v267 = vunpack.c.l.b16 %v180
      %v268 = vunpack.c.h.b16 %v180
      %v269 = vunpack.c.l.b16 %v181
      %v270 = vunpack.c.h.b16 %v181
      %v271 = vunpack.c.l.b16 %v182
      %v272 = vunpack.c.h.b16 %v182
      %v273 = vunpack.c.l.b16 %v183
      %v274 = vunpack.c.h.b16 %v183
      %v275 = vunpack.c.l.b16 %v184
      %v276 = vunpack.c.h.b16 %v184
      %v277 = vunpack.c.l.b16 %v185
      %v278 = vunpack.c.h.b16 %v185
      %v279 = vunpack.c.l.b16 %v186
      %v280 = vunpack.c.h.b16 %v186
      %v281 = vunpack.c.l.b16 %v187
      %v282 = vunpack.c.h.b16 %v187
      %v283 = vunpack.c.l.b16 %v188
      %v284 = vunpack.c.h.b16 %v188
      %v285 = vunpack.c.l.b16 %v189
      %v286 = vunpack.c.h.b16 %v189
      %v287 = vunpack.c.l.b16 %v190
      %v288 = vunpack.c.h.b16 %v190
      %v289 = vunpack.c.l.b16 %v191
      %v290 = vunpack.c.h.b16 %v191
      %v291 = vpack.c.b16 %v253, %v251
      %v292 = vpack.c.b16 %v254, %v252
      %v293 = vpack.c.b16 %v257, %v255
      %v294 = vpack.c.b16 %v258, %v256
      %v295 = vpack.c.b16 %v261, %v259
      %v296 = vpack.c.b16 %v262, %v260
      %v297 = vpack.c.b16 %v265, %v263
      %v298 = vpack.c.b16 %v266, %v264
      %v299 = vpack.c.b16 %v269, %v267
      %v300 = vpack.c.b16 %v270, %v268
      %v301 = vpack.c.b16 %v273, %v271
      %v302 = vpack.c.b16 %v274, %v272
      %v303 = vpack.c.b16 %v277, %v275
      %v304 = vpack.c.b16 %v278, %v276
      %v305 = vpack.c.b16 %v281, %v279
      %v306 = vpack.c.b16 %v282, %v280
      %v307 = vpack.c.b16 %v285, %v283
      %v308 = vpack.c.b16 %v286, %v284
      %v309 = vpack.c.b16 %v289, %v287
      %v310 = vpack.c.b16 %v290, %v288
      %v363 = vunpack.c.l.b16 %v192
      %v364 = vunpack.c.l.b16 %v193
      %v365 = vunpack.c.l.b16 %v194
      %v366 = vunpack.c.l.b16 %v195
      %v367 = vunpack.c.l.b16 %v196
      %v368 = vunpack.c.l.b16 %v197
      %v369 = vunpack.c.l.b16 %v198
      %v370 = vunpack.c.l.b16 %v199
      %v371 = vunpack.c.l.b16 %v200
      %v372 = vunpack.c.l.b16 %v201
      %v373 = vunpack.c.l.b16 %v202
      %v374 = vunpack.c.l.b16 %v203
      %v375 = vunpack.c.l.b16 %v204
      %v376 = vunpack.c.l.b16 %v205
      %v377 = vunpack.c.l.b16 %v206
      %v378 = vunpack.c.l.b16 %v207
      %v379 = vunpack.c.l.b16 %v208
      %v380 = vunpack.c.l.b16 %v209
      %v381 = vunpack.c.l.b16 %v210
      %v382 = vunpack.c.l.b16 %v211
      %v383 = vunpack.c.l.b16 %v212
      %v384 = vunpack.c.l.b16 %v213
      %v385 = vunpack.c.l.b16 %v214
      %v386 = vunpack.c.l.b16 %v215
      %v387 = vunpack.c.l.b16 %v216
      %v388 = vunpack.c.l.b16 %v217
      %v389 = vunpack.c.l.b16 %v218
      %v390 = vunpack.c.l.b16 %v219
      %v391 = vunpack.c.l.b16 %v220
      %v392 = vunpack.c.l.b16 %v221
      %v393 = vunpack.c.l.b16 %v222
      %v394 = vunpack.c.l.b16 %v223
      %v395 = vpack.c.b16 %v364, %v363
      %v396 = vpack.c.b16 %v366, %v365
      %v397 = vpack.c.b16 %v368, %v367
      %v398 = vpack.c.b16 %v370, %v369
      %v399 = vpack.c.b16 %v372, %v371
      %v400 = vpack.c.b16 %v374, %v373
      %v401 = vpack.c.b16 %v376, %v375
      %v402 = vpack.c.b16 %v378, %v377
      %v403 = vpack.c.b16 %v380, %v379
      %v404 = vpack.c.b16 %v382, %v381
      %v405 = vpack.c.b16 %v384, %v383
      %v406 = vpack.c.b16 %v386, %v385
      %v407 = vpack.c.b16 %v388, %v387
      %v408 = vpack.c.b16 %v390, %v389
      %v409 = vpack.c.b16 %v392, %v391
      %v410 = vpack.c.b16 %v394, %v393
      %427 = vmatprep.subr.bf16.mxu0 0
      %428 = vmatpush1.bf16.msra.mxu0 %v395
      %429 = vmatprep.subr.bf16.mxu0 0
      %430 = vmatpush1.bf16.msra.mxu0 %v396
      %431 = vmatprep.subr.bf16.mxu0 0
      %432 = vmatpush1.bf16.msra.mxu0 %v397
      %433 = vmatprep.subr.bf16.mxu0 0
      %434 = vmatpush1.bf16.msra.mxu0 %v398
      %435 = vmatprep.subr.bf16.mxu0 0
      %436 = vmatpush1.bf16.msra.mxu0 %v399
      %437 = vmatprep.subr.bf16.mxu0 0
      %438 = vmatpush1.bf16.msra.mxu0 %v400
      %439 = vmatprep.subr.bf16.mxu0 0
      %440 = vmatpush1.bf16.msra.mxu0 %v401
      %441 = vmatprep.subr.bf16.mxu0 0
      %442 = vmatpush1.bf16.msra.mxu0 %v402
      %443 = vmatprep.subr.bf16.mxu0 0
      %444 = vmatpush1.bf16.msra.mxu0 %v403
      %445 = vmatprep.subr.bf16.mxu0 0
      %446 = vmatpush1.bf16.msra.mxu0 %v404
      %447 = vmatprep.subr.bf16.mxu0 0
      %448 = vmatpush1.bf16.msra.mxu0 %v405
      %449 = vmatprep.subr.bf16.mxu0 0
      %450 = vmatpush1.bf16.msra.mxu0 %v406
      %451 = vmatprep.subr.bf16.mxu0 0
      %452 = vmatpush1.bf16.msra.mxu0 %v407
      %453 = vmatprep.subr.bf16.mxu0 0
      %454 = vmatpush1.bf16.msra.mxu0 %v408
      %455 = vmatprep.subr.bf16.mxu0 0
      %456 = vmatpush1.bf16.msra.mxu0 %v409
      %457 = vmatprep.subr.bf16.mxu0 0
      %458 = vmatpush1.bf16.msra.mxu0 %v410
      %459 = vmatprep.mubr.bf16.mxu0 %v292
      %460 = vmatmul.mubr.bf16.gmra.mrb[0].mxu0 %v291
      %v461 = vpop.f32.mrb[0].mxu0
      %v462 = vadd.f32 %v229, %v461
      %v463 = vpop.f32.mrb[0].mxu0
      %v464 = vpop.f32.mrb[0].mxu0
      %v465 = vadd.f32 %v229, %v464
      %v466 = vpop.f32.mrb[0].mxu0
      %467 = vmatprep.mubr.bf16.mxu0 %v294
      %468 = vmatmul.mubr.bf16.gmra.mrb[0].mxu0 %v293
      %v469 = vpop.f32.mrb[0].mxu0
      %v470 = vadd.f32 %v229, %v469
      %v471 = vpop.f32.mrb[0].mxu0
      %v472 = vpop.f32.mrb[0].mxu0
      %v473 = vadd.f32 %v229, %v472
      %v474 = vpop.f32.mrb[0].mxu0
      %475 = vmatprep.mubr.bf16.mxu0 %v296
      %476 = vmatmul.mubr.bf16.gmra.mrb[0].mxu0 %v295
      %v477 = vpop.f32.mrb[0].mxu0
      %v478 = vadd.f32 %v229, %v477
      %v479 = vpop.f32.mrb[0].mxu0
      %v480 = vpop.f32.mrb[0].mxu0
      %v481 = vadd.f32 %v229, %v480
      %v482 = vpop.f32.mrb[0].mxu0
      %483 = vmatprep.mubr.bf16.mxu0 %v298
      %484 = vmatmul.mubr.bf16.gmra.mrb[0].mxu0 %v297
      %v485 = vpop.f32.mrb[0].mxu0
      %v486 = vadd.f32 %v229, %v485
      %v487 = vpop.f32.mrb[0].mxu0
      %v488 = vpop.f32.mrb[0].mxu0
      %v489 = vadd.f32 %v229, %v488
      %v490 = vpop.f32.mrb[0].mxu0
      %491 = vmatprep.mubr.bf16.mxu0 %v300
      %492 = vmatmul.mubr.bf16.gmra.mrb[0].mxu0 %v299
      %v493 = vpop.f32.mrb[0].mxu0
      %v494 = vadd.f32 %v229, %v493
      %v495 = vpop.f32.mrb[0].mxu0
      %v496 = vpop.f32.mrb[0].mxu0
      %v497 = vadd.f32 %v229, %v496
      %v498 = vpop.f32.mrb[0].mxu0
      %499 = vmatprep.mubr.bf16.mxu0 %v302
      %500 = vmatmul.mubr.bf16.gmra.mrb[0].mxu0 %v301
      %v501 = vpop.f32.mrb[0].mxu0
      %v502 = vadd.f32 %v229, %v501
      %v503 = vpop.f32.mrb[0].mxu0
      %v504 = vpop.f32.mrb[0].mxu0
      %v505 = vadd.f32 %v229, %v504
      %v506 = vpop.f32.mrb[0].mxu0
      %507 = vmatprep.mubr.bf16.mxu0 %v304
      %508 = vmatmul.mubr.bf16.gmra.mrb[0].mxu0 %v303
      %v509 = vpop.f32.mrb[0].mxu0
      %v510 = vadd.f32 %v229, %v509
      %v511 = vpop.f32.mrb[0].mxu0
      %v512 = vpop.f32.mrb[0].mxu0
      %v513 = vadd.f32 %v229, %v512
      %v514 = vpop.f32.mrb[0].mxu0
      %515 = vmatprep.mubr.bf16.mxu0 %v306
      %516 = vmatmul.mubr.bf16.gmra.mrb[0].mxu0 %v305
      %v517 = vpop.f32.mrb[0].mxu0
      %v518 = vadd.f32 %v229, %v517
      %v519 = vpop.f32.mrb[0].mxu0
      %v520 = vpop.f32.mrb[0].mxu0
      %v521 = vadd.f32 %v229, %v520
      %v522 = vpop.f32.mrb[0].mxu0
      %523 = vmatprep.mubr.bf16.mxu0 %v308
      %524 = vmatmul.mubr.bf16.gmra.mrb[0].mxu0 %v307
      %v525 = vpop.f32.mrb[0].mxu0
      %v526 = vadd.f32 %v229, %v525
      %v527 = vpop.f32.mrb[0].mxu0
      %v528 = vpop.f32.mrb[0].mxu0
      %v529 = vadd.f32 %v229, %v528
      %v530 = vpop.f32.mrb[0].mxu0
      %531 = vmatprep.mubr.bf16.mxu0 %v310
      %532 = vmatmul.mubr.bf16.gmra.mrb[0].mxu0 %v309
      %v533 = vpop.f32.mrb[0].mxu0
      %v534 = vadd.f32 %v229, %v533
      %v535 = vpop.f32.mrb[0].mxu0
      %v536 = vpop.f32.mrb[0].mxu0
      %v537 = vadd.f32 %v229, %v536
      %v538 = vpop.f32.mrb[0].mxu0
      %539 = vdwg.mxu0
      %v540 = vtanh.pop %v462
      %v541 = vtanh.pop %v465
      %v542 = vtanh.pop %v470
      %v543 = vtanh.pop %v473
      %v544 = vtanh.pop %v478
      %v545 = vtanh.pop %v481
      %v546 = vtanh.pop %v486
      %v547 = vtanh.pop %v489
      %v548 = vtanh.pop %v494
      %v549 = vtanh.pop %v497
      %v550 = vtanh.pop %v502
      %v551 = vtanh.pop %v505
      %v552 = vtanh.pop %v510
      %v553 = vtanh.pop %v513
      %v554 = vtanh.pop %v518
      %v555 = vtanh.pop %v521
      %v556 = vtanh.pop %v526
      %v557 = vtanh.pop %v529
      %v558 = vtanh.pop %v534
      %v559 = vtanh.pop %v537
      %v560 = vmax.f32 %v540, %v545
      %v561 = vmax.f32 %v541, %v546
      %v562 = vmax.f32 %v542, %v547
      %v563 = vmax.f32 %v543, %v548
      %v564 = vmax.f32 %v544, %v549
      %v565 = vmax.f32 %v550, %v555
      %v566 = vmax.f32 %v551, %v556
      %v567 = vmax.f32 %v552, %v557
      %v568 = vmax.f32 %v553, %v558
      %v569 = vmax.f32 %v554, %v559
      %v570 = vmax.f32 %v560, %v565
      %v571 = vmax.f32 %v561, %v566
      %v572 = vmax.f32 %v562, %v567
      %v573 = vmax.f32 %v563, %v568
      %v574 = vmax.f32 %v564, %v569
      %575 = vst [vmem:[%s170] sm:$0xff] %v570
      %576 = vst [vmem:[%s170 + $0x8] sm:$0xff] %v571
      %577 = vst [vmem:[%s170 + $0x10] sm:$0xff] %v572
      %578 = vst [vmem:[%s170 + $0x18] sm:$0xff] %v573
      %579 = vst [vmem:[%s170 + $0x20] sm:$0xff] %v574
      %p580 = scmp.lt.s32.totalorder %s14, 1
      %s581 = scalar_select %p580, %s14, 1
      %s582 = smul.addr %s581, 5
      %s583 = smul.addr %s582, 8
      %s584 = scalar_lea.vmem %s3, %s583
      // Predicated region
      $region33: #{lenet5_forward.4} parent=31 // pred_check
        %p585 = pneg %p100
      $region34: #{lenet5_forward.4} parent=31 // pred_check_branch
        %587 = sbr.rel (%p585) target = $region36
      $region35: #{lenet5_forward.4} parent=31 // pred_region
        _
      $region36: #{lenet5_forward.4} parent=31 // pred_fallthru
        _
    $region32: #{lenet5_forward.4} parent=5 // pred_fallthru
      _
    %p588 = scmp.le.s32.totalorder 2, %s9
    // Predicated region
    $region37: #{lenet5_forward.4} parent=5 // pred_check
      %p589 = pneg %p588
    $region38: #{lenet5_forward.4} parent=5 // pred_check_branch
      %591 = sbr.rel (%p589) target = $region40
    $region39: #{lenet5_forward.4} parent=5 // pred_region
      %s592 = ssub.s32 %s9, 2
      // Predicated region
      $region41: #{lenet5_forward.4} parent=39 // pred_check
        %p593 = pneg %p106
      $region42: #{lenet5_forward.4} parent=39 // pred_check_branch
        %595 = sbr.rel (%p593) target = $region44
      $region43: #{lenet5_forward.4} parent=39 // pred_region
        %p596 = scmp.lt.s32.totalorder %s15, 1
        %s597 = scalar_select %p596, %s15, 1
        %s598 = smul.addr %s597, 5
        %s599 = smul.addr %s598, 8
        %s600 = scalar_lea.vmem %s3, %s599
      $region44: #{lenet5_forward.4} parent=39 // pred_fallthru
        _
    $region40: #{lenet5_forward.4} parent=5 // pred_fallthru
      _
  $region6: #{lenet5_forward.4} parent=0 // loop_footer
    %s13 = sadd.s32 1, %s9
  $region7: #{lenet5_forward.4} parent=0 // loop_footer_branch
    %8 = sbr.rel target = $region3
  $region8: #{lenet5_forward.4} parent=0 // loop_exit
    _

// kernel: lenet5_forward.5
$region0: #{lenet5_forward.5}
  #allocation0 [shape = 'u32[]', space=smem, size = 0x4, offset = 0x4, fixed_abs, tag = 'smem constant byte address 0x4 - core index']
  #allocation1 [shape = 'u32[144,128]{1,0:T(1,128)}', space=vmem, size = 0x12000, scoped, tag = 'internal scratch']
  %s0 = inlined_call_operand.vmem [shape: bf16[8,576], index: 0, kind: input, shape index: {}]
  %s1 = inlined_call_operand.vmem [shape: bf16[576,128], index: 1, kind: input, shape index: {}]
  %s2 = inlined_call_operand.vmem [shape: f32[1,128], index: 2, kind: input, shape index: {}]
  %s3 = inlined_call_operand.vmem [shape: bf16[128,128], index: 3, kind: input, shape index: {}]
  %s4 = inlined_call_operand.vmem [shape: f32[1,128], index: 4, kind: input, shape index: {}]
  %s5 = inlined_call_operand.vmem [shape: bf16[128,128], index: 5, kind: input, shape index: {}]
  %s6 = inlined_call_operand.vmem [shape: f32[1,128], index: 6, kind: input, shape index: {}]
  %s7 = inlined_call_operand.vmem [shape: f32[8,128], index: 7, kind: output, shape index: {}]
  %s8 = sld [smem:[#allocation0]]
  $region38: #{lenet5_forward.5} parent=0
    _
  %s10 = ssub.s32 1, %s8
  %s11 = scalar_select 0, %s10, %s8
  // Predicated region
  $region2: #{lenet5_forward.5} parent=0 // pred_check
    _
  $region3: #{lenet5_forward.5} parent=0 // pred_check_branch
    %13 = sbr.rel (0) target = $region5
  $region4: #{lenet5_forward.5} parent=0 // pred_region
    _
  $region5: #{lenet5_forward.5} parent=0 // pred_fallthru
    _
  // Predicated region
  $region6: #{lenet5_forward.5} parent=0 // pred_check
    _
  $region7: #{lenet5_forward.5} parent=0 // pred_check_branch
    %15 = sbr.rel (0) target = $region9
  $region8: #{lenet5_forward.5} parent=0 // pred_region
    _
  $region9: #{lenet5_forward.5} parent=0 // pred_fallthru
    _
  // Predicated region
  $region10: #{lenet5_forward.5} parent=0 // pred_check
    _
  $region11: #{lenet5_forward.5} parent=0 // pred_check_branch
    %17 = sbr.rel (0) target = $region13
  $region12: #{lenet5_forward.5} parent=0 // pred_region
    _
  $region13: #{lenet5_forward.5} parent=0 // pred_fallthru
    _
  // Predicated region
  $region14: #{lenet5_forward.5} parent=0 // pred_check
    _
  $region15: #{lenet5_forward.5} parent=0 // pred_check_branch
    %19 = sbr.rel (0) target = $region17
  $region16: #{lenet5_forward.5} parent=0 // pred_region
    _
  $region17: #{lenet5_forward.5} parent=0 // pred_fallthru
    _
  // Predicated region
  $region18: #{lenet5_forward.5} parent=0 // pred_check
    _
  $region19: #{lenet5_forward.5} parent=0 // pred_check_branch
    %21 = sbr.rel (0) target = $region21
  $region20: #{lenet5_forward.5} parent=0 // pred_region
    _
  $region21: #{lenet5_forward.5} parent=0 // pred_fallthru
    _
  // Predicated region
  $region22: #{lenet5_forward.5} parent=0 // pred_check
    _
  $region23: #{lenet5_forward.5} parent=0 // pred_check_branch
    %23 = sbr.rel (0) target = $region25
  $region24: #{lenet5_forward.5} parent=0 // pred_region
    _
  $region25: #{lenet5_forward.5} parent=0 // pred_fallthru
    _
  // Predicated region
  $region26: #{lenet5_forward.5} parent=0 // pred_check
    _
  $region27: #{lenet5_forward.5} parent=0 // pred_check_branch
    %25 = sbr.rel (0) target = $region29
  $region28: #{lenet5_forward.5} parent=0 // pred_region
    _
  $region29: #{lenet5_forward.5} parent=0 // pred_fallthru
    _
  %v27 = vld [vmem:[%s0] sm:$0xff]
  %v28 = vld [vmem:[%s0 + $0x8] sm:$0xff]
  %v29 = vld [vmem:[%s0 + $0x10] sm:$0xf]
  %v30 = vld [vmem:[%s1] sm:$0xf]
  %v31 = vld [vmem:[%s1 + $0x4] sm:$0xf]
  %v32 = vld [vmem:[%s1 + $0x8] sm:$0xf]
  %v33 = vld [vmem:[%s1 + $0xc] sm:$0xf]
  %v34 = vld [vmem:[%s1 + $0x10] sm:$0xf]
  %v35 = vld [vmem:[%s1 + $0x14] sm:$0xf]
  %v36 = vld [vmem:[%s1 + $0x18] sm:$0xf]
  %v37 = vld [vmem:[%s1 + $0x1c] sm:$0xf]
  %v38 = vld [vmem:[%s1 + $0x20] sm:$0xf]
  %v39 = vld [vmem:[%s1 + $0x24] sm:$0xf]
  %v40 = vld [vmem:[%s1 + $0x28] sm:$0xf]
  %v41 = vld [vmem:[%s1 + $0x2c] sm:$0xf]
  %v42 = vld [vmem:[%s1 + $0x30] sm:$0xf]
  %v43 = vld [vmem:[%s1 + $0x34] sm:$0xf]
  %v44 = vld [vmem:[%s1 + $0x38] sm:$0xf]
  %v45 = vld [vmem:[%s1 + $0x3c] sm:$0xf]
  %v46 = vld [vmem:[%s1 + $0x40] sm:$0xf]
  %v47 = vld [vmem:[%s1 + $0x44] sm:$0xf]
  %v48 = vld [vmem:[%s1 + $0x48] sm:$0xf]
  %v49 = vld [vmem:[%s1 + $0x4c] sm:$0xf]
  %v50 = vld [vmem:[%s1 + $0x50] sm:$0xf]
  %v51 = vld [vmem:[%s1 + $0x54] sm:$0xf]
  %v52 = vld [vmem:[%s1 + $0x58] sm:$0xf]
  %v53 = vld [vmem:[%s1 + $0x5c] sm:$0xf]
  %v54 = vld [vmem:[%s1 + $0x60] sm:$0xf]
  %v55 = vld [vmem:[%s1 + $0x64] sm:$0xf]
  %v56 = vld [vmem:[%s1 + $0x68] sm:$0xf]
  %v57 = vld [vmem:[%s1 + $0x6c] sm:$0xf]
  %v58 = vld [vmem:[%s1 + $0x70] sm:$0xf]
  %v59 = vld [vmem:[%s1 + $0x74] sm:$0xf]
  %v60 = vld [vmem:[%s1 + $0x78] sm:$0xf]
  %v61 = vld [vmem:[%s1 + $0x7c] sm:$0xf]
  %v62 = vld [vmem:[%s1 + $0x80] sm:$0xf]
  %v63 = vld [vmem:[%s1 + $0x84] sm:$0xf]
  %v64 = vld [vmem:[%s1 + $0x88] sm:$0xf]
  %v65 = vld [vmem:[%s1 + $0x8c] sm:$0xf]
  %v66 = vld [vmem:[%s1 + $0x90] sm:$0xf]
  %v67 = vld [vmem:[%s1 + $0x94] sm:$0xf]
  %v68 = vld [vmem:[%s1 + $0x98] sm:$0xf]
  %v69 = vld [vmem:[%s1 + $0x9c] sm:$0xf]
  %v70 = vld [vmem:[%s1 + $0xa0] sm:$0xf]
  %v71 = vld [vmem:[%s1 + $0xa4] sm:$0xf]
  %v72 = vld [vmem:[%s1 + $0xa8] sm:$0xf]
  %v73 = vld [vmem:[%s1 + $0xac] sm:$0xf]
  %v74 = vld [vmem:[%s1 + $0xb0] sm:$0xf]
  %v75 = vld [vmem:[%s1 + $0xb4] sm:$0xf]
  %v76 = vld [vmem:[%s1 + $0xb8] sm:$0xf]
  %v77 = vld [vmem:[%s1 + $0xbc] sm:$0xf]
  %v78 = vld [vmem:[%s1 + $0xc0] sm:$0xf]
  %v79 = vld [vmem:[%s1 + $0xc4] sm:$0xf]
  %v80 = vld [vmem:[%s1 + $0xc8] sm:$0xf]
  %v81 = vld [vmem:[%s1 + $0xcc] sm:$0xf]
  %v82 = vld [vmem:[%s1 + $0xd0] sm:$0xf]
  %v83 = vld [vmem:[%s1 + $0xd4] sm:$0xf]
  %v84 = vld [vmem:[%s1 + $0xd8] sm:$0xf]
  %v85 = vld [vmem:[%s1 + $0xdc] sm:$0xf]
  %v86 = vld [vmem:[%s1 + $0xe0] sm:$0xf]
  %v87 = vld [vmem:[%s1 + $0xe4] sm:$0xf]
  %v88 = vld [vmem:[%s1 + $0xe8] sm:$0xf]
  %v89 = vld [vmem:[%s1 + $0xec] sm:$0xf]
  %v90 = vld [vmem:[%s1 + $0xf0] sm:$0xf]
  %v91 = vld [vmem:[%s1 + $0xf4] sm:$0xf]
  %v92 = vld [vmem:[%s1 + $0xf8] sm:$0xf]
  %v93 = vld [vmem:[%s1 + $0xfc] sm:$0xf]
  %v94 = vld [vmem:[%s1 + $0x100] sm:$0xf]
  %v95 = vld [vmem:[%s1 + $0x104] sm:$0xf]
  %v96 = vld [vmem:[%s1 + $0x108] sm:$0xf]
  %v97 = vld [vmem:[%s1 + $0x10c] sm:$0xf]
  %v98 = vld [vmem:[%s1 + $0x110] sm:$0xf]
  %v99 = vld [vmem:[%s1 + $0x114] sm:$0xf]
  %v100 = vld [vmem:[%s1 + $0x118] sm:$0xf]
  %v101 = vld [vmem:[%s1 + $0x11c] sm:$0xf]
  %v102 = vld [vmem:[%s2] sm:$0x1]
  %v104 = vlaneseq
  %v105 = vshrl.u32 %v104, 7
  %v106 = vsub.s32 0, %v105
  %v107 = vrot.slane %v102, %v106
  %v112 = vunpack.c.l.b16 %v27
  %v113 = vunpack.c.h.b16 %v27
  %v114 = vunpack.c.l.b16 %v28
  %v115 = vunpack.c.h.b16 %v28
  %v116 = vunpack.c.l.b16 %v29
  %v117 = vpack.c.b16 %v112, %v112
  %v118 = vpack.c.b16 %v113, %v113
  %v119 = vpack.c.b16 %v114, %v114
  %v120 = vpack.c.b16 %v115, %v115
  %v121 = vpack.c.b16 %v116, %v116
  %v198 = vunpack.c.l.b16 %v30
  %v199 = vunpack.c.l.b16 %v31
  %v200 = vunpack.c.l.b16 %v32
  %v201 = vunpack.c.l.b16 %v33
  %v202 = vunpack.c.l.b16 %v34
  %v203 = vunpack.c.l.b16 %v35
  %v204 = vunpack.c.l.b16 %v36
  %v205 = vunpack.c.l.b16 %v37
  %v206 = vunpack.c.l.b16 %v38
  %v207 = vunpack.c.l.b16 %v39
  %v208 = vunpack.c.l.b16 %v40
  %v209 = vunpack.c.l.b16 %v41
  %v210 = vunpack.c.l.b16 %v42
  %v211 = vunpack.c.l.b16 %v43
  %v212 = vunpack.c.l.b16 %v44
  %v213 = vunpack.c.l.b16 %v45
  %v214 = vunpack.c.l.b16 %v46
  %v215 = vunpack.c.l.b16 %v47
  %v216 = vunpack.c.l.b16 %v48
  %v217 = vunpack.c.l.b16 %v49
  %v218 = vunpack.c.l.b16 %v50
  %v219 = vunpack.c.l.b16 %v51
  %v220 = vunpack.c.l.b16 %v52
  %v221 = vunpack.c.l.b16 %v53
  %v222 = vunpack.c.l.b16 %v54
  %v223 = vunpack.c.l.b16 %v55
  %v224 = vunpack.c.l.b16 %v56
  %v225 = vunpack.c.l.b16 %v57
  %v226 = vunpack.c.l.b16 %v58
  %v227 = vunpack.c.l.b16 %v59
  %v228 = vunpack.c.l.b16 %v60
  %v229 = vunpack.c.l.b16 %v61
  %v230 = vunpack.c.l.b16 %v62
  %v231 = vunpack.c.l.b16 %v63
  %v232 = vunpack.c.l.b16 %v64
  %v233 = vunpack.c.l.b16 %v65
  %v234 = vunpack.c.l.b16 %v66
  %v235 = vunpack.c.l.b16 %v67
  %v236 = vunpack.c.l.b16 %v68
  %v237 = vunpack.c.l.b16 %v69
  %v238 = vunpack.c.l.b16 %v70
  %v239 = vunpack.c.l.b16 %v71
  %v240 = vunpack.c.l.b16 %v72
  %v241 = vunpack.c.l.b16 %v73
  %v242 = vunpack.c.l.b16 %v74
  %v243 = vunpack.c.l.b16 %v75
  %v244 = vunpack.c.l.b16 %v76
  %v245 = vunpack.c.l.b16 %v77
  %v246 = vunpack.c.l.b16 %v78
  %v247 = vunpack.c.l.b16 %v79
  %v248 = vunpack.c.l.b16 %v80
  %v249 = vunpack.c.l.b16 %v81
  %v250 = vunpack.c.l.b16 %v82
  %v251 = vunpack.c.l.b16 %v83
  %v252 = vunpack.c.l.b16 %v84
  %v253 = vunpack.c.l.b16 %v85
  %v254 = vunpack.c.l.b16 %v86
  %v255 = vunpack.c.l.b16 %v87
  %v256 = vunpack.c.l.b16 %v88
  %v257 = vunpack.c.l.b16 %v89
  %v258 = vunpack.c.l.b16 %v90
  %v259 = vunpack.c.l.b16 %v91
  %v260 = vunpack.c.l.b16 %v92
  %v261 = vunpack.c.l.b16 %v93
  %v262 = vunpack.c.l.b16 %v94
  %v263 = vunpack.c.l.b16 %v95
  %v264 = vunpack.c.l.b16 %v96
  %v265 = vunpack.c.l.b16 %v97
  %v266 = vunpack.c.l.b16 %v98
  %v267 = vunpack.c.l.b16 %v99
  %v268 = vunpack.c.l.b16 %v100
  %v269 = vunpack.c.l.b16 %v101
  %v270 = vpack.c.b16 %v199, %v198
  %v271 = vpack.c.b16 %v201, %v200
  %v272 = vpack.c.b16 %v203, %v202
  %v273 = vpack.c.b16 %v205, %v204
  %v274 = vpack.c.b16 %v207, %v206
  %v275 = vpack.c.b16 %v209, %v208
  %v276 = vpack.c.b16 %v211, %v210
  %v277 = vpack.c.b16 %v213, %v212
  %v278 = vpack.c.b16 %v215, %v214
  %v279 = vpack.c.b16 %v217, %v216
  %v280 = vpack.c.b16 %v219, %v218
  %v281 = vpack.c.b16 %v221, %v220
  %v282 = vpack.c.b16 %v223, %v222
  %v283 = vpack.c.b16 %v225, %v224
  %v284 = vpack.c.b16 %v227, %v226
  %v285 = vpack.c.b16 %v229, %v228
  %v286 = vpack.c.b16 %v231, %v230
  %v287 = vpack.c.b16 %v233, %v232
  %v288 = vpack.c.b16 %v235, %v234
  %v289 = vpack.c.b16 %v237, %v236
  %v290 = vpack.c.b16 %v239, %v238
  %v291 = vpack.c.b16 %v241, %v240
  %v292 = vpack.c.b16 %v243, %v242
  %v293 = vpack.c.b16 %v245, %v244
  %v294 = vpack.c.b16 %v247, %v246
  %v295 = vpack.c.b16 %v249, %v248
  %v296 = vpack.c.b16 %v251, %v250
  %v297 = vpack.c.b16 %v253, %v252
  %v298 = vpack.c.b16 %v255, %v254
  %v299 = vpack.c.b16 %v257, %v256
  %v300 = vpack.c.b16 %v259, %v258
  %v301 = vpack.c.b16 %v261, %v260
  %v302 = vpack.c.b16 %v263, %v262
  %v303 = vpack.c.b16 %v265, %v264
  %v304 = vpack.c.b16 %v267, %v266
  %v305 = vpack.c.b16 %v269, %v268
  %vm342 = vcmask 523264
  %v344 = vsel %vm342, %v121, 0
  %346 = vmatprep.subr.bf16.mxu0 0
  %347 = vmatpush1.bf16.msra.mxu0 %v270
  %348 = vmatprep.subr.bf16.mxu0 0
  %349 = vmatpush1.bf16.msra.mxu0 %v271
  %350 = vmatprep.subr.bf16.mxu0 0
  %351 = vmatpush1.bf16.msra.mxu0 %v272
  %352 = vmatprep.subr.bf16.mxu0 0
  %353 = vmatpush1.bf16.msra.mxu0 %v273
  %354 = vmatprep.subr.bf16.mxu0 0
  %355 = vmatpush1.bf16.msra.mxu0 %v274
  %356 = vmatprep.subr.bf16.mxu0 0
  %357 = vmatpush1.bf16.msra.mxu0 %v275
  %358 = vmatprep.subr.bf16.mxu0 0
  %359 = vmatpush1.bf16.msra.mxu0 %v276
  %360 = vmatprep.subr.bf16.mxu0 0
  %361 = vmatpush1.bf16.msra.mxu0 %v277
  %362 = vmatprep.subr.bf16.mxu0 0
  %363 = vmatpush1.bf16.msra.mxu0 %v278
  %364 = vmatprep.subr.bf16.mxu0 0
  %365 = vmatpush1.bf16.msra.mxu0 %v279
  %366 = vmatprep.subr.bf16.mxu0 0
  %367 = vmatpush1.bf16.msra.mxu0 %v280
  %368 = vmatprep.subr.bf16.mxu0 0
  %369 = vmatpush1.bf16.msra.mxu0 %v281
  %370 = vmatprep.subr.bf16.mxu0 0
  %371 = vmatpush1.bf16.msra.mxu0 %v282
  %372 = vmatprep.subr.bf16.mxu0 0
  %373 = vmatpush1.bf16.msra.mxu0 %v283
  %374 = vmatprep.subr.bf16.mxu0 0
  %375 = vmatpush1.bf16.msra.mxu0 %v284
  %376 = vmatprep.subr.bf16.mxu0 0
  %377 = vmatpush1.bf16.msra.mxu0 %v285
  %378 = vmatprep.mubr.bf16.mxu0 %v118
  %379 = vmatmul.mubr.bf16.gmra.mrb[0].mxu0 %v117
  %v380 = vpop.f32.mrb[0].mxu0
  %v381 = vadd.f32 %v107, %v380
  %v382 = vpop.f32.mrb[0].mxu0
  %v383 = vpop.f32.mrb[0].mxu0
  %v384 = vpop.f32.mrb[0].mxu0
  %385 = vdwg.mxu0
  %386 = vmatprep.subr.bf16.mxu0 0
  %387 = vmatpush1.bf16.msra.mxu0 %v286
  %388 = vmatprep.subr.bf16.mxu0 0
  %389 = vmatpush1.bf16.msra.mxu0 %v287
  %390 = vmatprep.subr.bf16.mxu0 0
  %391 = vmatpush1.bf16.msra.mxu0 %v288
  %392 = vmatprep.subr.bf16.mxu0 0
  %393 = vmatpush1.bf16.msra.mxu0 %v289
  %394 = vmatprep.subr.bf16.mxu0 0
  %395 = vmatpush1.bf16.msra.mxu0 %v290
  %396 = vmatprep.subr.bf16.mxu0 0
  %397 = vmatpush1.bf16.msra.mxu0 %v291
  %398 = vmatprep.subr.bf16.mxu0 0
  %399 = vmatpush1.bf16.msra.mxu0 %v292
  %400 = vmatprep.subr.bf16.mxu0 0
  %401 = vmatpush1.bf16.msra.mxu0 %v293
  %402 = vmatprep.subr.bf16.mxu0 0
  %403 = vmatpush1.bf16.msra.mxu0 %v294
  %404 = vmatprep.subr.bf16.mxu0 0
  %405 = vmatpush1.bf16.msra.mxu0 %v295
  %406 = vmatprep.subr.bf16.mxu0 0
  %407 = vmatpush1.bf16.msra.mxu0 %v296
  %408 = vmatprep.subr.bf16.mxu0 0
  %409 = vmatpush1.bf16.msra.mxu0 %v297
  %410 = vmatprep.subr.bf16.mxu0 0
  %411 = vmatpush1.bf16.msra.mxu0 %v298
  %412 = vmatprep.subr.bf16.mxu0 0
  %413 = vmatpush1.bf16.msra.mxu0 %v299
  %414 = vmatprep.subr.bf16.mxu0 0
  %415 = vmatpush1.bf16.msra.mxu0 %v300
  %416 = vmatprep.subr.bf16.mxu0 0
  %417 = vmatpush1.bf16.msra.mxu0 %v301
  %418 = vmatprep.mubr.bf16.mxu0 %v120
  %419 = vmatmul.mubr.bf16.gmra.mrb[0].mxu0 %v119
  %v420 = vpop.f32.mrb[0].mxu0
  %v421 = vadd.f32 %v381, %v420
  %v422 = vpop.f32.mrb[0].mxu0
  %v423 = vpop.f32.mrb[0].mxu0
  %v424 = vpop.f32.mrb[0].mxu0
  %425 = vdwg.mxu0
  %426 = vmatprep.subr.bf16.mxu0 0
  %427 = vmatpush1.bf16.msra.mxu0 %v302
  %428 = vmatprep.subr.bf16.mxu0 0
  %429 = vmatpush1.bf16.msra.mxu0 %v303
  %430 = vmatprep.subr.bf16.mxu0 0
  %431 = vmatpush1.bf16.msra.mxu0 %v304
  %432 = vmatprep.subr.bf16.mxu0 0
  %433 = vmatpush1.bf16.msra.mxu0 %v305
  %434 = vmatprep.subr.bf16.mxu0 0
  %435 = vmatpush1.bf16.msra.mxu0 0
  %436 = vmatprep.subr.bf16.mxu0 0
  %437 = vmatpush1.bf16.msra.mxu0 0
  %438 = vmatprep.subr.bf16.mxu0 0
  %439 = vmatpush1.bf16.msra.mxu0 0
  %440 = vmatprep.subr.bf16.mxu0 0
  %441 = vmatpush1.bf16.msra.mxu0 0
  %442 = vmatprep.subr.bf16.mxu0 0
  %443 = vmatpush1.bf16.msra.mxu0 0
  %444 = vmatprep.subr.bf16.mxu0 0
  %445 = vmatpush1.bf16.msra.mxu0 0
  %446 = vmatprep.subr.bf16.mxu0 0
  %447 = vmatpush1.bf16.msra.mxu0 0
  %448 = vmatprep.subr.bf16.mxu0 0
  %449 = vmatpush1.bf16.msra.mxu0 0
  %450 = vmatprep.subr.bf16.mxu0 0
  %451 = vmatpush1.bf16.msra.mxu0 0
  %452 = vmatprep.subr.bf16.mxu0 0
  %453 = vmatpush1.bf16.msra.mxu0 0
  %454 = vmatprep.subr.bf16.mxu0 0
  %455 = vmatpush1.bf16.msra.mxu0 0
  %456 = vmatprep.subr.bf16.mxu0 0
  %457 = vmatpush1.bf16.msra.mxu0 0
  %458 = vmatprep.mubr.bf16.mxu0 0
  %459 = vmatmul.mubr.bf16.gmra.mrb[0].mxu0 %v344
  %v460 = vpop.f32.mrb[0].mxu0
  %v461 = vadd.f32 %v421, %v460
  %v462 = vpop.f32.mrb[0].mxu0
  %v463 = vpop.f32.mrb[0].mxu0
  %v464 = vpop.f32.mrb[0].mxu0
  %465 = vdwg.mxu0
  %v466 = vtanh.pop %v461
  %v467 = vpack.c.bf16 %v466, %v466
  %v468 = vld [vmem:[%s3] sm:$0xf]
  %v469 = vld [vmem:[%s3 + $0x4] sm:$0xf]
  %v470 = vld [vmem:[%s3 + $0x8] sm:$0xf]
  %v471 = vld [vmem:[%s3 + $0xc] sm:$0xf]
  %v472 = vld [vmem:[%s3 + $0x10] sm:$0xf]
  %v473 = vld [vmem:[%s3 + $0x14] sm:$0xf]
  %v474 = vld [vmem:[%s3 + $0x18] sm:$0xf]
  %v475 = vld [vmem:[%s3 + $0x1c] sm:$0xf]
  %v476 = vld [vmem:[%s3 + $0x20] sm:$0xf]
  %v477 = vld [vmem:[%s3 + $0x24] sm:$0xf]
  %v478 = vld [vmem:[%s3 + $0x28] sm:$0xf]
  %v479 = vld [vmem:[%s3 + $0x2c] sm:$0xf]
  %v480 = vld [vmem:[%s3 + $0x30] sm:$0xf]
  %v481 = vld [vmem:[%s3 + $0x34] sm:$0xf]
  %v482 = vld [vmem:[%s3 + $0x38] sm:$0xf]
  %v483 = vld [vmem:[%s3 + $0x3c] sm:$0xf]
  %v484 = vld [vmem:[%s4] sm:$0x1]
  %v486 = vlaneseq
  %v487 = vshrl.u32 %v486, 7
  %v488 = vsub.s32 0, %v487
  %v489 = vrot.slane %v484, %v488
  %v507 = vunpack.c.l.b16 %v468
  %v508 = vunpack.c.l.b16 %v469
  %v509 = vunpack.c.l.b16 %v470
  %v510 = vunpack.c.l.b16 %v471
  %v511 = vunpack.c.l.b16 %v472
  %v512 = vunpack.c.l.b16 %v473
  %v513 = vunpack.c.l.b16 %v474
  %v514 = vunpack.c.l.b16 %v475
  %v515 = vunpack.c.l.b16 %v476
  %v516 = vunpack.c.l.b16 %v477
  %v517 = vunpack.c.l.b16 %v478
  %v518 = vunpack.c.l.b16 %v479
  %v519 = vunpack.c.l.b16 %v480
  %v520 = vunpack.c.l.b16 %v481
  %v521 = vunpack.c.l.b16 %v482
  %v522 = vunpack.c.l.b16 %v483
  %v523 = vpack.c.b16 %v508, %v507
  %v524 = vpack.c.b16 %v510, %v509
  %v525 = vpack.c.b16 %v512, %v511
  %v526 = vpack.c.b16 %v514, %v513
  %v527 = vpack.c.b16 %v516, %v515
  %v528 = vpack.c.b16 %v518, %v517
  %v529 = vpack.c.b16 %v520, %v519
  %v530 = vpack.c.b16 %v522, %v521
  %539 = vmatprep.subr.bf16.mxu0 0
  %540 = vmatpush1.bf16.msra.mxu0 %v523
  %541 = vmatprep.subr.bf16.mxu0 0
  %542 = vmatpush1.bf16.msra.mxu0 %v524
  %543 = vmatprep.subr.bf16.mxu0 0
  %544 = vmatpush1.bf16.msra.mxu0 %v525
  %545 = vmatprep.subr.bf16.mxu0 0
  %546 = vmatpush1.bf16.msra.mxu0 %v526
  %547 = vmatprep.subr.bf16.mxu0 0
  %548 = vmatpush1.bf16.msra.mxu0 %v527
  %549 = vmatprep.subr.bf16.mxu0 0
  %550 = vmatpush1.bf16.msra.mxu0 %v528
  %551 = vmatprep.subr.bf16.mxu0 0
  %552 = vmatpush1.bf16.msra.mxu0 %v529
  %553 = vmatprep.subr.bf16.mxu0 0
  %554 = vmatpush1.bf16.msra.mxu0 %v530
  %555 = vmatprep.subr.bf16.mxu0 0
  %556 = vmatpush1.bf16.msra.mxu0 0
  %557 = vmatprep.subr.bf16.mxu0 0
  %558 = vmatpush1.bf16.msra.mxu0 0
  %559 = vmatprep.subr.bf16.mxu0 0
  %560 = vmatpush1.bf16.msra.mxu0 0
  %561 = vmatprep.subr.bf16.mxu0 0
  %562 = vmatpush1.bf16.msra.mxu0 0
  %563 = vmatprep.subr.bf16.mxu0 0
  %564 = vmatpush1.bf16.msra.mxu0 0
  %565 = vmatprep.subr.bf16.mxu0 0
  %566 = vmatpush1.bf16.msra.mxu0 0
  %567 = vmatprep.subr.bf16.mxu0 0
  %568 = vmatpush1.bf16.msra.mxu0 0
  %569 = vmatprep.subr.bf16.mxu0 0
  %570 = vmatpush1.bf16.msra.mxu0 0
  %571 = vmatprep.mubr.bf16.mxu0 0
  %572 = vmatmul.mubr.bf16.gmra.mrb[0].mxu0 %v467
  %v573 = vpop.f32.mrb[0].mxu0
  %v574 = vadd.f32 %v489, %v573
  %v575 = vpop.f32.mrb[0].mxu0
  %v576 = vpop.f32.mrb[0].mxu0
  %v577 = vpop.f32.mrb[0].mxu0
  %578 = vdwg.mxu0
  %v579 = vtanh.pop %v574
  %v580 = vpack.c.bf16 %v579, %v579
  %v581 = vld [vmem:[%s5] sm:$0xf]
  %v582 = vld [vmem:[%s5 + $0x4] sm:$0xf]
  %v583 = vld [vmem:[%s5 + $0x8] sm:$0xf]
  %v584 = vld [vmem:[%s5 + $0xc] sm:$0xf]
  %v585 = vld [vmem:[%s5 + $0x10] sm:$0xf]
  %v586 = vld [vmem:[%s5 + $0x14] sm:$0xf]
  %v587 = vld [vmem:[%s5 + $0x18] sm:$0xf]
  %v588 = vld [vmem:[%s5 + $0x1c] sm:$0xf]
  %v589 = vld [vmem:[%s5 + $0x20] sm:$0xf]
  %v590 = vld [vmem:[%s5 + $0x24] sm:$0xf]
  %v591 = vld [vmem:[%s5 + $0x28] sm:$0xf]
  %v592 = vld [vmem:[%s5 + $0x2c] sm:$0xf]
  %v593 = vld [vmem:[%s5 + $0x30] sm:$0xf]
  %v594 = vld [vmem:[%s5 + $0x34] sm:$0xf]
  %v595 = vld [vmem:[%s5 + $0x38] sm:$0xf]
  %v596 = vld [vmem:[%s5 + $0x3c] sm:$0xf]
  %v597 = vld [vmem:[%s6] sm:$0x1]
  %v599 = vlaneseq
  %v600 = vshrl.u32 %v599, 7
  %v601 = vsub.s32 0, %v600
  %v602 = vrot.slane %v597, %v601
  %v620 = vunpack.c.l.b16 %v581
  %v621 = vunpack.c.l.b16 %v582
  %v622 = vunpack.c.l.b16 %v583
  %v623 = vunpack.c.l.b16 %v584
  %v624 = vunpack.c.l.b16 %v585
  %v625 = vunpack.c.l.b16 %v586
  %v626 = vunpack.c.l.b16 %v587
  %v627 = vunpack.c.l.b16 %v588
  %v628 = vunpack.c.l.b16 %v589
  %v629 = vunpack.c.l.b16 %v590
  %v630 = vunpack.c.l.b16 %v591
  %v631 = vunpack.c.l.b16 %v592
  %v632 = vunpack.c.l.b16 %v593
  %v633 = vunpack.c.l.b16 %v594
  %v634 = vunpack.c.l.b16 %v595
  %v635 = vunpack.c.l.b16 %v596
  %v636 = vpack.c.b16 %v621, %v620
  %v637 = vpack.c.b16 %v623, %v622
  %v638 = vpack.c.b16 %v625, %v624
  %v639 = vpack.c.b16 %v627, %v626
  %v640 = vpack.c.b16 %v629, %v628
  %v641 = vpack.c.b16 %v631, %v630
  %v642 = vpack.c.b16 %v633, %v632
  %v643 = vpack.c.b16 %v635, %v634
  %652 = vmatprep.subr.bf16.mxu0 0
  %653 = vmatpush1.bf16.msra.mxu0 %v636
  %654 = vmatprep.subr.bf16.mxu0 0
  %655 = vmatpush1.bf16.msra.mxu0 %v637
  %656 = vmatprep.subr.bf16.mxu0 0
  %657 = vmatpush1.bf16.msra.mxu0 %v638
  %658 = vmatprep.subr.bf16.mxu0 0
  %659 = vmatpush1.bf16.msra.mxu0 %v639
  %660 = vmatprep.subr.bf16.mxu0 0
  %661 = vmatpush1.bf16.msra.mxu0 %v640
  %662 = vmatprep.subr.bf16.mxu0 0
  %663 = vmatpush1.bf16.msra.mxu0 %v641
  %664 = vmatprep.subr.bf16.mxu0 0
  %665 = vmatpush1.bf16.msra.mxu0 %v642
  %666 = vmatprep.subr.bf16.mxu0 0
  %667 = vmatpush1.bf16.msra.mxu0 %v643
  %668 = vmatprep.subr.bf16.mxu0 0
  %669 = vmatpush1.bf16.msra.mxu0 0
  %670 = vmatprep.subr.bf16.mxu0 0
  %671 = vmatpush1.bf16.msra.mxu0 0
  %672 = vmatprep.subr.bf16.mxu0 0
  %673 = vmatpush1.bf16.msra.mxu0 0
  %674 = vmatprep.subr.bf16.mxu0 0
  %675 = vmatpush1.bf16.msra.mxu0 0
  %676 = vmatprep.subr.bf16.mxu0 0
  %677 = vmatpush1.bf16.msra.mxu0 0
  %678 = vmatprep.subr.bf16.mxu0 0
  %679 = vmatpush1.bf16.msra.mxu0 0
  %680 = vmatprep.subr.bf16.mxu0 0
  %681 = vmatpush1.bf16.msra.mxu0 0
  %682 = vmatprep.subr.bf16.mxu0 0
  %683 = vmatpush1.bf16.msra.mxu0 0
  %684 = vmatprep.mubr.bf16.mxu0 0
  %685 = vmatmul.mubr.bf16.gmra.mrb[0].mxu0 %v580
  %v686 = vpop.f32.mrb[0].mxu0
  %v687 = vadd.f32 %v602, %v686
  %v688 = vpop.f32.mrb[0].mxu0
  %v689 = vpop.f32.mrb[0].mxu0
  %v690 = vpop.f32.mrb[0].mxu0
  %691 = vdwg.mxu0
  %692 = vst [vmem:[%s7] sm:$0xff] %v687
  // Predicated region
  $region30: #{lenet5_forward.5} parent=0 // pred_check
    _
  $region31: #{lenet5_forward.5} parent=0 // pred_check_branch
    %694 = sbr.rel (0) target = $region33
  $region32: #{lenet5_forward.5} parent=0 // pred_region
    _
  $region33: #{lenet5_forward.5} parent=0 // pred_fallthru
    _
  // Predicated region
  $region34: #{lenet5_forward.5} parent=0 // pred_check
    _
  $region35: #{lenet5_forward.5} parent=0 // pred_check_branch
    %696 = sbr.rel (0) target = $region37
  $region36: #{lenet5_forward.5} parent=0 // pred_region
    _
  $region37: #{lenet5_forward.5} parent=0 // pred_fallthru
    _

</llo_original>
